<compile_context>
chip_gen: v7x
topology: tpu7x:2x2x1
jax: 0.10.0
libtpu: 0.0.40
codegen_flags: <defaults>
</compile_context>

<pallas_src>
import functools

import jax
import jax.numpy as jnp
import numpy as np
from jax.experimental import pallas as pl
from jax.experimental.pallas import tpu as pltpu


def _chroma_subsample_kernel(s_ref, rp_ref, x_ref, y_ref, cb_ref, cr_ref, *,
                             lane_chunk):
    """One (batch, row-tile, col-tile) block.

    s_ref : (3*LW, 2*LW) bf16 constant: [Y copy | Cb col-pair sum | Cr col-pair sum]
    rp_ref: (tH//2, tH)  bf16 constant: 0.25 * row-pair sum (finishes the 2x2 avg)
    x_ref : (1, tH, 3*tW) interleaved input rows (channel fastest along lanes)
    y_ref : (1, tH, tW)
    cb_ref, cr_ref: (1, tH//2, tW//2)
    """
    LW = lane_chunk
    half = LW // 2
    n_chunks = x_ref.shape[2] // (3 * LW)
    cdtype = s_ref.dtype                          # bf16 compute dtype

    def do_chunk(k):
        # (tH, 3*LW) chunk; lane 3*j + c holds (pixel j, channel c).
        xc = x_ref[0, :, k * 3 * LW:(k + 1) * 3 * LW].astype(cdtype)
        # One MXU matmul: de-interleave Y + Cb/Cr column-pair sums (0/1 weights).
        # RHS is read straight from VMEM each time (not hoisted across the
        # unrolled loop) to keep vreg pressure near zero.
        t = jnp.dot(xc, s_ref[...], preferred_element_type=jnp.float32)
        # Y: lane-dense LW-wide store per chunk.
        y_ref[0, :, k * LW:(k + 1) * LW] = t[:, :LW].astype(y_ref.dtype)
        return t[:, LW:]                          # (tH, LW) = [cb sums | cr sums]

    def pool_rows(c):
        # Row-pair average of f32 column sums.  Manual hi/lo bf16 split keeps
        # both MXU passes in bf16 while staying exact for 8-bit pixel data
        # (sums <= 510 split exactly into two bf16 parts); f32 accumulation.
        c_hi = c.astype(jnp.bfloat16)
        c_lo = (c - c_hi.astype(jnp.float32)).astype(jnp.bfloat16)
        out = jnp.dot(rp_ref[...], c_hi, preferred_element_type=jnp.float32)
        out = out + jnp.dot(rp_ref[...], c_lo, preferred_element_type=jnp.float32)
        return out                                # (tH//2, n)

    # Process chunks in pairs: concatenating the two 64-lane chroma halves makes
    # every cb/cr output store a full 128-lane (lane-dense) store.
    for p in range(n_chunks // 2):
        c0 = do_chunk(2 * p)
        c1 = do_chunk(2 * p + 1)
        cb2 = jnp.concatenate([c0[:, :half], c1[:, :half]], axis=1)   # (tH, LW)
        cr2 = jnp.concatenate([c0[:, half:], c1[:, half:]], axis=1)   # (tH, LW)
        cb_ref[0, :, p * LW:(p + 1) * LW] = pool_rows(cb2).astype(cb_ref.dtype)
        cr_ref[0, :, p * LW:(p + 1) * LW] = pool_rows(cr2).astype(cr_ref.dtype)

    # Odd tail chunk (only when a column tile holds an odd number of chunks).
    if n_chunks % 2:
        k = n_chunks - 1
        pooled = pool_rows(do_chunk(k))           # (tH//2, LW) = [cb | cr]
        cb_ref[0, :, k * half:(k + 1) * half] = pooled[:, :half].astype(cb_ref.dtype)
        cr_ref[0, :, k * half:(k + 1) * half] = pooled[:, half:].astype(cr_ref.dtype)


def _selection_matrix(lw):
    """(3*lw, 2*lw): cols [0:lw]=Y copy, [lw:1.5lw]=Cb pair-sum, [1.5lw:2lw]=Cr pair-sum."""
    s = np.zeros((3 * lw, 2 * lw), np.float32)
    j = np.arange(lw)
    s[3 * j, j] = 1.0                               # Y  <- channel 0 of pixel j
    q = np.arange(lw // 2)
    s[3 * (2 * q) + 1, lw + q] = 1.0                # Cb <- channel 1 of pixels 2q, 2q+1
    s[3 * (2 * q + 1) + 1, lw + q] = 1.0
    s[3 * (2 * q) + 2, lw + lw // 2 + q] = 1.0      # Cr <- channel 2 of pixels 2q, 2q+1
    s[3 * (2 * q + 1) + 2, lw + lw // 2 + q] = 1.0
    return s


def _row_pair_matrix(th):
    """(th//2, th): 0.25 * (row 2p + row 2p+1) — finishes the 2x2 average."""
    r = np.zeros((th // 2, th), np.float32)
    p = np.arange(th // 2)
    r[p, 2 * p] = 0.25
    r[p, 2 * p + 1] = 0.25
    return r


def _divisors(n):
    return [d for d in range(1, n + 1) if n % d == 0]


def _pick_row_tile(H, tile_rows):
    # tH and tH//2 must be sublane-aligned (x8) unless they span the full dim.
    cands = [d for d in _divisors(H) if d % 16 == 0 and d <= tile_rows]
    if cands:
        return max(cands)
    # TODO(synk): H with no multiple-of-16 divisor (e.g. 1080) falls back to a
    # full-height block; a masked ragged-row path would bound VMEM tighter.
    return H


def _pick_lane_chunk(W, lane_chunk):
    if W % lane_chunk == 0:
        return lane_chunk
    # Largest even divisor <= lane_chunk: keeps the one-hot matrix tiny (no
    # S=(3W,2W) VMEM cliff) and chroma pixel pairs never straddle a chunk.
    return max(d for d in _divisors(W) if d % 2 == 0 and d <= lane_chunk)


def _pick_col_tile(W, LW, tH, itemsize, tile_cols, max_unroll=8,
                   input_block_budget=8 << 20):
    # tW must divide W and keep every out-block lane-aligned:
    #   tW == W, or tW % 256 == 0 (so both tW and tW//2 are multiples of 128).
    valid = [k * LW for k in _divisors(W // LW)
             if (k * LW == W) or (k * LW) % 256 == 0]
    capped = [tw for tw in valid
              if tw <= tile_cols
              and tw // LW <= max_unroll
              and 3 * tw * tH * itemsize <= input_block_budget]
    return max(capped) if capped else W


def chroma_subsampling(image, *, tile_rows=256, tile_cols=1024, lane_chunk=128,
                       vmem_limit_bytes=48 * 1024 * 1024):
    """image: (B, H, W, 3) -> (y (B,H,W), cb (B,H/2,W/2), cr (B,H/2,W/2)).

    Precision: matmuls run with bf16 operands and f32 accumulation (explicit
    choice) — exact for bf16 images and 8-bit-valued pixel data; arbitrary f32
    images round to bf16 (same as XLA's default-precision dot).
    Tiling: tile_rows 256-512 on v5e/v6e (128 MiB VMEM; raise vmem_limit_bytes
    to ~96 MiB for 512), 128-256 on v7x (64 MiB/TC VMEM, keep limit <= ~48 MiB).
    """
    B, H, W, C = image.shape
    assert C == 3, "expected channel-last 3-channel image"
    assert H % 2 == 0 and W % 2 == 0, "2x2 average pool needs even H and W"

    tH = _pick_row_tile(H, tile_rows)
    LW = _pick_lane_chunk(W, lane_chunk)
    tW = _pick_col_tile(W, LW, tH, np.dtype(image.dtype).itemsize, tile_cols)

    # Tiny 0/1 (and 0.25) constants, built once, bf16 (exact), resident in VMEM.
    S = jnp.asarray(_selection_matrix(LW), dtype=jnp.bfloat16)
    Rp = jnp.asarray(_row_pair_matrix(tH), dtype=jnp.bfloat16)

    # Metadata-only reshape: channels stay interleaved along lanes; no HBM copy.
    x3 = image.reshape(B, H, 3 * W)

    kernel = functools.partial(_chroma_subsample_kernel, lane_chunk=LW)
    y, cb, cr = pl.pallas_call(
        kernel,
        out_shape=(
            jax.ShapeDtypeStruct((B, H, W), image.dtype),
            jax.ShapeDtypeStruct((B, H // 2, W // 2), image.dtype),
            jax.ShapeDtypeStruct((B, H // 2, W // 2), image.dtype),
        ),
        grid_spec=pltpu.PrefetchScalarGridSpec(
            num_scalar_prefetch=0,
            grid=(B, H // tH, W // tW),
            in_specs=[
                # Constant matrices: block index never changes -> DMA'd once and
                # kept resident across the whole grid.
                pl.BlockSpec((3 * LW, 2 * LW), lambda b, h, w: (0, 0)),
                pl.BlockSpec((tH // 2, tH), lambda b, h, w: (0, 0)),
                pl.BlockSpec((1, tH, 3 * tW), lambda b, h, w: (b, h, w)),
            ],
            out_specs=(
                pl.BlockSpec((1, tH, tW), lambda b, h, w: (b, h, w)),
                pl.BlockSpec((1, tH // 2, tW // 2), lambda b, h, w: (b, h, w)),
                pl.BlockSpec((1, tH // 2, tW // 2), lambda b, h, w: (b, h, w)),
            ),
        ),
        compiler_params=pltpu.CompilerParams(
            dimension_semantics=("parallel", "parallel", "parallel"),
            vmem_limit_bytes=vmem_limit_bytes,
        ),
    )(S, Rp, x3)
    return y, cb, cr


def _reference(image):
    y = image[..., 0]
    B, H, W, _ = image.shape
    blocks = image.reshape(B, H // 2, 2, W // 2, 2, 3)
    cb = blocks[..., 1].mean(axis=(2, 4))
    cr = blocks[..., 2].mean(axis=(2, 4))
    return y, cb, cr


if __name__ == "__main__":
    key = jax.random.PRNGKey(0)

    def check(B, H, W, **kw):
        k = jax.random.fold_in(key, H * 10000 + W)
        # 8-bit style pixel values (exact through the bf16 matmul path).
        image = jax.random.randint(k, (B, H, W, 3), 0, 256).astype(jnp.float32)
        outs = chroma_subsampling(image, **kw)
        y, cb, cr = jax.block_until_ready(outs)
        y_r, cb_r, cr_r = _reference(image)
        assert y.shape == (B, H, W) and y.dtype == image.dtype, y.shape
        assert cb.shape == (B, H // 2, W // 2), cb.shape
        assert cr.shape == (B, H // 2, W // 2), cr.shape
        assert jnp.allclose(y, y_r, atol=1e-5), "y mismatch vs reference"
        assert jnp.allclose(cb, cb_r, atol=1e-5), "cb mismatch vs reference"
        assert jnp.allclose(cr, cr_r, atol=1e-5), "cr mismatch vs reference"

    # Chunk-pair (lane-dense cb/cr store) path: tW=256 -> 2 chunks per tile;
    # grid (2, 2, 1) exercises the (batch, row-tile, col-tile) tiling.
    check(2, 32, 256, tile_rows=16)
    # Odd-tail path: tW=128 -> single chunk per tile (narrow cb/cr tail stores).
    check(2, 32, 128, tile_rows=16)
    # Ragged width (W % 128 != 0): lane chunk falls back to a small divisor
    # without any S=(3W,2W) VMEM cliff.
    check(1, 32, 96, tile_rows=16)

    print("KERNEL_OK")
</pallas_src>

<mosaic_0001>
module attributes {stable_mosaic.version = 11 : i64} {
  func.func @_chroma_subsample_kernel(%arg0: i32, %arg1: i32, %arg2: i32, %arg3: memref<384x256xbf16, #tpu.memory_space<vmem>>, %arg4: memref<8x16xbf16, #tpu.memory_space<vmem>>, %arg5: memref<1x16x768xf32, #tpu.memory_space<vmem>>, %arg6: memref<1x16x256xf32, #tpu.memory_space<vmem>>, %arg7: memref<1x8x128xf32, #tpu.memory_space<vmem>>, %arg8: memref<1x8x128xf32, #tpu.memory_space<vmem>>) attributes {dimension_semantics = [#tpu.dimension_semantics<parallel>, #tpu.dimension_semantics<parallel>, #tpu.dimension_semantics<parallel>], iteration_bounds = array<i64: 2, 2, 1>, scalar_prefetch = 0 : i64, scratch_operands = 0 : i64, tpu.core_type = #tpu.core_type<tc>, window_params = [{pipeline_mode = #tpu.pipeline_mode<synchronous>, transform_indices = @transform_0, window_bounds = array<i64: 384, 256>}, {pipeline_mode = #tpu.pipeline_mode<synchronous>, transform_indices = @transform_1, window_bounds = array<i64: 8, 16>}, {transform_indices = @transform_2, window_bounds = array<i64: 1, 16, 768>}, {transform_indices = @transform_3, window_bounds = array<i64: 1, 16, 256>}, {transform_indices = @transform_4, window_bounds = array<i64: 1, 8, 128>}, {transform_indices = @transform_5, window_bounds = array<i64: 1, 8, 128>}]} {
    %c0 = arith.constant 0 : index
    %c0_0 = arith.constant 0 : index
    %c0_1 = arith.constant 0 : index
    %0 = vector.load %arg5[%c0, %c0_0, %c0_1] : memref<1x16x768xf32, #tpu.memory_space<vmem>>, vector<1x16x384xf32>
    %1 = vector.shape_cast %0 : vector<1x16x384xf32> to vector<16x384xf32>
    %2 = arith.truncf %1 : vector<16x384xf32> to vector<16x384xbf16>
    %c0_2 = arith.constant 0 : index
    %c0_3 = arith.constant 0 : index
    %3 = vector.load %arg3[%c0_2, %c0_3] : memref<384x256xbf16, #tpu.memory_space<vmem>>, vector<384x256xbf16>
    %cst = arith.constant dense<0.000000e+00> : vector<16x256xf32>
    %4 = tpu.matmul %2, %3, %cst {dimension_numbers = #tpu.dot_dimension_numbers<[1], [0], [0], [1], [0, 0, 1, 1], [], []>} : vector<16x384xbf16>, vector<384x256xbf16>, vector<16x256xf32> -> vector<16x256xf32>
    %5 = vector.extract_strided_slice %4 {offsets = [0, 0], sizes = [16, 128], strides = [1, 1]} : vector<16x256xf32> to vector<16x128xf32>
    %c0_4 = arith.constant 0 : index
    %c0_5 = arith.constant 0 : index
    %c0_6 = arith.constant 0 : index
    %6 = vector.load %arg6[%c0_4, %c0_5, %c0_6] : memref<1x16x256xf32, #tpu.memory_space<vmem>>, vector<1x16x128xf32>
    %7 = vector.shape_cast %6 : vector<1x16x128xf32> to vector<16x128xf32>
    %8 = vector.shape_cast %5 : vector<16x128xf32> to vector<1x16x128xf32>
    tpu.vector_store %arg6[%c0_4, %c0_5, %c0_6], %8 {strides = array<i32>} : memref<1x16x256xf32, #tpu.memory_space<vmem>>, vector<1x16x128xf32>,
    %9 = vector.extract_strided_slice %4 {offsets = [0, 128], sizes = [16, 128], strides = [1, 1]} : vector<16x256xf32> to vector<16x128xf32>
    %c0_7 = arith.constant 0 : index
    %c0_8 = arith.constant 0 : index
    %c384 = arith.constant 384 : index
    %10 = vector.load %arg5[%c0_7, %c0_8, %c384] : memref<1x16x768xf32, #tpu.memory_space<vmem>>, vector<1x16x384xf32>
    %11 = vector.shape_cast %10 : vector<1x16x384xf32> to vector<16x384xf32>
    %12 = arith.truncf %11 : vector<16x384xf32> to vector<16x384xbf16>
    %c0_9 = arith.constant 0 : index
    %c0_10 = arith.constant 0 : index
    %13 = vector.load %arg3[%c0_9, %c0_10] : memref<384x256xbf16, #tpu.memory_space<vmem>>, vector<384x256xbf16>
    %cst_11 = arith.constant dense<0.000000e+00> : vector<16x256xf32>
    %14 = tpu.matmul %12, %13, %cst_11 {dimension_numbers = #tpu.dot_dimension_numbers<[1], [0], [0], [1], [0, 0, 1, 1], [], []>} : vector<16x384xbf16>, vector<384x256xbf16>, vector<16x256xf32> -> vector<16x256xf32>
    %15 = vector.extract_strided_slice %14 {offsets = [0, 0], sizes = [16, 128], strides = [1, 1]} : vector<16x256xf32> to vector<16x128xf32>
    %c0_12 = arith.constant 0 : index
    %c0_13 = arith.constant 0 : index
    %c128 = arith.constant 128 : index
    %16 = vector.load %arg6[%c0_12, %c0_13, %c128] : memref<1x16x256xf32, #tpu.memory_space<vmem>>, vector<1x16x128xf32>
    %17 = vector.shape_cast %16 : vector<1x16x128xf32> to vector<16x128xf32>
    %18 = vector.shape_cast %15 : vector<16x128xf32> to vector<1x16x128xf32>
    tpu.vector_store %arg6[%c0_12, %c0_13, %c128], %18 {strides = array<i32>} : memref<1x16x256xf32, #tpu.memory_space<vmem>>, vector<1x16x128xf32>,
    %19 = vector.extract_strided_slice %14 {offsets = [0, 128], sizes = [16, 128], strides = [1, 1]} : vector<16x256xf32> to vector<16x128xf32>
    %20 = vector.extract_strided_slice %9 {offsets = [0, 0], sizes = [16, 64], strides = [1, 1]} : vector<16x128xf32> to vector<16x64xf32>
    %21 = vector.extract_strided_slice %19 {offsets = [0, 0], sizes = [16, 64], strides = [1, 1]} : vector<16x128xf32> to vector<16x64xf32>
    %22 = tpu.concatenate %20, %21 in 1 : vector<16x64xf32>, vector<16x64xf32> -> vector<16x128xf32>
    %23 = vector.extract_strided_slice %9 {offsets = [0, 64], sizes = [16, 64], strides = [1, 1]} : vector<16x128xf32> to vector<16x64xf32>
    %24 = vector.extract_strided_slice %19 {offsets = [0, 64], sizes = [16, 64], strides = [1, 1]} : vector<16x128xf32> to vector<16x64xf32>
    %25 = tpu.concatenate %23, %24 in 1 : vector<16x64xf32>, vector<16x64xf32> -> vector<16x128xf32>
    %26 = arith.truncf %22 : vector<16x128xf32> to vector<16x128xbf16>
    %27 = arith.extf %26 : vector<16x128xbf16> to vector<16x128xf32>
    %28 = arith.subf %22, %27 : vector<16x128xf32>
    %29 = arith.truncf %28 : vector<16x128xf32> to vector<16x128xbf16>
    %c0_14 = arith.constant 0 : index
    %c0_15 = arith.constant 0 : index
    %30 = vector.load %arg4[%c0_14, %c0_15] : memref<8x16xbf16, #tpu.memory_space<vmem>>, vector<8x16xbf16>
    %cst_16 = arith.constant dense<0.000000e+00> : vector<8x128xf32>
    %31 = tpu.matmul %30, %26, %cst_16 {dimension_numbers = #tpu.dot_dimension_numbers<[1], [0], [0], [1], [0, 0, 1, 1], [], []>} : vector<8x16xbf16>, vector<16x128xbf16>, vector<8x128xf32> -> vector<8x128xf32>
    %c0_17 = arith.constant 0 : index
    %c0_18 = arith.constant 0 : index
    %32 = vector.load %arg4[%c0_17, %c0_18] : memref<8x16xbf16, #tpu.memory_space<vmem>>, vector<8x16xbf16>
    %cst_19 = arith.constant dense<0.000000e+00> : vector<8x128xf32>
    %33 = tpu.matmul %32, %29, %cst_19 {dimension_numbers = #tpu.dot_dimension_numbers<[1], [0], [0], [1], [0, 0, 1, 1], [], []>} : vector<8x16xbf16>, vector<16x128xbf16>, vector<8x128xf32> -> vector<8x128xf32>
    %34 = arith.addf %31, %33 : vector<8x128xf32>
    %c0_20 = arith.constant 0 : index
    %c0_21 = arith.constant 0 : index
    %c0_22 = arith.constant 0 : index
    %35 = vector.load %arg7[%c0_20, %c0_21, %c0_22] : memref<1x8x128xf32, #tpu.memory_space<vmem>>, vector<1x8x128xf32>
    %36 = vector.shape_cast %35 : vector<1x8x128xf32> to vector<8x128xf32>
    %37 = vector.shape_cast %34 : vector<8x128xf32> to vector<1x8x128xf32>
    tpu.vector_store %arg7[%c0_20, %c0_21, %c0_22], %37 {strides = array<i32>} : memref<1x8x128xf32, #tpu.memory_space<vmem>>, vector<1x8x128xf32>,
    %38 = arith.truncf %25 : vector<16x128xf32> to vector<16x128xbf16>
    %39 = arith.extf %38 : vector<16x128xbf16> to vector<16x128xf32>
    %40 = arith.subf %25, %39 : vector<16x128xf32>
    %41 = arith.truncf %40 : vector<16x128xf32> to vector<16x128xbf16>
    %c0_23 = arith.constant 0 : index
    %c0_24 = arith.constant 0 : index
    %42 = vector.load %arg4[%c0_23, %c0_24] : memref<8x16xbf16, #tpu.memory_space<vmem>>, vector<8x16xbf16>
    %cst_25 = arith.constant dense<0.000000e+00> : vector<8x128xf32>
    %43 = tpu.matmul %42, %38, %cst_25 {dimension_numbers = #tpu.dot_dimension_numbers<[1], [0], [0], [1], [0, 0, 1, 1], [], []>} : vector<8x16xbf16>, vector<16x128xbf16>, vector<8x128xf32> -> vector<8x128xf32>
    %c0_26 = arith.constant 0 : index
    %c0_27 = arith.constant 0 : index
    %44 = vector.load %arg4[%c0_26, %c0_27] : memref<8x16xbf16, #tpu.memory_space<vmem>>, vector<8x16xbf16>
    %cst_28 = arith.constant dense<0.000000e+00> : vector<8x128xf32>
    %45 = tpu.matmul %44, %41, %cst_28 {dimension_numbers = #tpu.dot_dimension_numbers<[1], [0], [0], [1], [0, 0, 1, 1], [], []>} : vector<8x16xbf16>, vector<16x128xbf16>, vector<8x128xf32> -> vector<8x128xf32>
    %46 = arith.addf %43, %45 : vector<8x128xf32>
    %c0_29 = arith.constant 0 : index
    %c0_30 = arith.constant 0 : index
    %c0_31 = arith.constant 0 : index
    %47 = vector.load %arg8[%c0_29, %c0_30, %c0_31] : memref<1x8x128xf32, #tpu.memory_space<vmem>>, vector<1x8x128xf32>
    %48 = vector.shape_cast %47 : vector<1x8x128xf32> to vector<8x128xf32>
    %49 = vector.shape_cast %46 : vector<8x128xf32> to vector<1x8x128xf32>
    tpu.vector_store %arg8[%c0_29, %c0_30, %c0_31], %49 {strides = array<i32>} : memref<1x8x128xf32, #tpu.memory_space<vmem>>, vector<1x8x128xf32>,
    return
  }
  func.func @transform_0(%arg0: i32, %arg1: i32, %arg2: i32) -> (i32, i32) {
    %c0_i32 = arith.constant 0 : i32
    %c0_i32_0 = arith.constant 0 : i32
    %c0_i32_1 = arith.constant 0 : i32
    return %c0_i32, %c0_i32_0 : i32, i32
  }
  func.func @transform_1(%arg0: i32, %arg1: i32, %arg2: i32) -> (i32, i32) {
    %c0_i32 = arith.constant 0 : i32
    %c0_i32_0 = arith.constant 0 : i32
    %c0_i32_1 = arith.constant 0 : i32
    return %c0_i32, %c0_i32_0 : i32, i32
  }
  func.func @transform_2(%arg0: i32, %arg1: i32, %arg2: i32) -> (i32, i32, i32) {
    %c0_i32 = arith.constant 0 : i32
    return %arg0, %arg1, %arg2 : i32, i32, i32
  }
  func.func @transform_3(%arg0: i32, %arg1: i32, %arg2: i32) -> (i32, i32, i32) {
    %c0_i32 = arith.constant 0 : i32
    return %arg0, %arg1, %arg2 : i32, i32, i32
  }
  func.func @transform_4(%arg0: i32, %arg1: i32, %arg2: i32) -> (i32, i32, i32) {
    %c0_i32 = arith.constant 0 : i32
    return %arg0, %arg1, %arg2 : i32, i32, i32
  }
  func.func @transform_5(%arg0: i32, %arg1: i32, %arg2: i32) -> (i32, i32, i32) {
    %c0_i32 = arith.constant 0 : i32
    return %arg0, %arg1, %arg2 : i32, i32, i32
  }
}

</mosaic_0001>

<llo_original>
// kernel: tpu_custom_call.1
$region0: #{tpu_custom_call.1}
  #allocation0 [shape = 'u32[]', space=smem, size = 0x4, offset = 0x4, fixed_abs, tag = 'smem constant byte address 0x4 - core index']
  #allocation1 [shape = 'u32[144,128]{1,0:T(1,128)}', space=vmem, size = 0x12000, scoped, tag = 'internal scratch']
  %s0 = inlined_call_operand.hbm [shape: bf16[384,256], index: 0, kind: input, shape index: {}]
  %s1 = inlined_call_operand.hbm [shape: bf16[8,16], index: 1, kind: input, shape index: {}]
  %s2 = inlined_call_operand.hbm [shape: f32[2,32,768], index: 2, kind: input, shape index: {}]
  %s3 = inlined_call_operand.hbm [shape: f32[2,32,256], index: 3, kind: output, shape index: {0}]
  %s4 = inlined_call_operand.hbm [shape: f32[2,16,128], index: 4, kind: output, shape index: {1}]
  %s5 = inlined_call_operand.hbm [shape: f32[2,16,128], index: 5, kind: output, shape index: {2}]
  %6 = xla_tuple %s3, %s4, %s5
  %s7 = sld [smem:[#allocation0]]
  $region73: #{tpu_custom_call.1} parent=0
    _
  %s9 = ssub.s32 1, %s7
  %s10 = scalar_select 0, %s9, %s7
  $region1: #{tpu_custom_call.1} parent=0
    #allocation2 [shape = 'u8[196608]{0}', space=vmem, size = 0x30000, scoped, tag = 'input window, operand 0, single buffered']
    #allocation3 [shape = 's32[2]{0}', space=sflag, size = 0x8, scoped, tag = 'scoped memory for tpu_custom_call.1']
    #allocation4 [shape = 's32[2]{0}', space=sflag, size = 0x8, scoped, tag = 'scoped memory for tpu_custom_call.1']
    #allocation5 [shape = 'u8[2048]{0}', space=vmem, size = 0x800, scoped, tag = 'input window, operand 1, single buffered']
    #allocation6 [shape = 's32[1]{0}', space=sflag, size = 0x4, scoped, tag = 'scoped memory for tpu_custom_call.1']
    #allocation7 [shape = 'u8[98304]{0}', space=vmem, size = 0x18000, scoped, tag = 'input window, operand 2']
    #allocation8 [shape = 'u8[32768]{0}', space=vmem, size = 0x8000, scoped, tag = 'output window, operand 0']
    #allocation9 [shape = 'u8[8192]{0}', space=vmem, size = 0x2000, scoped, tag = 'output window, operand 1']
    #allocation10 [shape = 's32[2]{0}', space=sflag, size = 0x8, scoped, tag = 'scoped memory for tpu_custom_call.1']
    #allocation11 [shape = 'u8[8192]{0}', space=vmem, size = 0x2000, scoped, tag = 'output window, operand 2']
    %11 = vsyncpa [#allocation3], 0
    %12 = vsyncpa [#allocation6], 0
    %13 = vsyncpa [#allocation4], 0
    %s14 = scalar_lea.sflag [#allocation4], 1
    %15 = vsyncpa %s14, 0
    %16 = vsyncpa [#allocation10], 0
    %s17 = scalar_lea.sflag [#allocation10], 1
    %18 = vsyncpa %s17, 0
    loop: start=0, step=1, limit=6
    $region2: #{tpu_custom_call.1} parent=1 // loop_pre_header
      _
    $region3: #{tpu_custom_call.1} parent=1 // loop_header
      %s20 = sphi 0, %s24
      %p21 = scmp.ge.s32.totalorder %s20, 6
      %s27 = sphi 0, %s46
      %s28 = sphi 0, %s42
      %s29 = sphi 0, %s38
      %s30 = sphi 0, %s27
      %s31 = sphi 0, %s28
      %s32 = sphi 0, %s29
      %s33 = sphi 0, %s30
      %s34 = sphi 0, %s31
      %s35 = sphi 0, %s32
      %s47 = sphi 0, %s47
      %s49 = sphi 0, %s47
      %s50 = sphi 0, %s49
      %s64 = sphi 0, %s50
      %s68 = sphi 0, %s68
      %s70 = sphi 0, %s68
      %s71 = sphi 0, %s70
      %s85 = sphi 0, %s71
      %s95 = sphi 0, %s97
      %s98 = sphi 0, %s95
      %s99 = sphi 0, %s98
      %s115 = sphi 0, %s99
      %s125 = sphi 0, %s127
      %s128 = sphi 0, %s125
      %s129 = sphi 0, %s128
      %s145 = sphi 0, %s129
      %s155 = sphi 0, %s157
      %s158 = sphi 0, %s155
      %s159 = sphi 0, %s158
      %s175 = sphi 0, %s159
      %s185 = sphi 0, %s187
      %s188 = sphi 0, %s185
      %s189 = sphi 0, %s188
      %s205 = sphi 0, %s189
    $region4: #{tpu_custom_call.1} parent=1 // loop_header_branch
      %23 = sbr.rel (%p21) target = $region8
    $region5: #{tpu_custom_call.1} parent=1 // loop_body
      %s25 = ssub.s32 %s20, 1
      %s26 = ssub.s32 %s20, 2
      %s36 = sadd.s32 1, %s29
      %p37 = scmp.ge.s32.totalorder %s36, 1
      %s38 = scalar_select %p37, 0, %s36
      %s39 = sadd.s32 1, %s28
      %s40 = scalar_select %p37, %s39, %s28
      %p41 = scmp.ge.s32.totalorder %s40, 2
      %s42 = scalar_select %p41, 0, %s40
      %s43 = sadd.s32 1, %s27
      %s44 = scalar_select %p41, %s43, %s27
      %p45 = scmp.ge.s32.totalorder %s44, 2
      %s46 = scalar_select %p45, 0, %s44
      %s48 = sadd.s32 %s47, 1
      %p51 = scmp.eq.s32.totalorder %s20, 3
      %p52 = scmp.ne.s32.totalorder %s47, %s49
      %p53 = scmp.eq.s32.totalorder %s20, 0
      %p54 = por %p52, %p53
      %p55 = scmp.ne.s32.totalorder %s47, %s49
      %p56 = scmp.eq.s32.totalorder %s25, 3
      %p57 = por %p55, %p56
      %p58 = scmp.ne.s32.totalorder %s49, %s50
      %p59 = scmp.eq.s32.totalorder %s25, 0
      %p60 = por %p58, %p59
      %p61 = scmp.ne.s32.totalorder %s49, %s50
      %p62 = scmp.eq.s32.totalorder %s26, 3
      %p63 = por %p61, %p62
      %p65 = scmp.ne.s32.totalorder %s50, %s64
      %p66 = scmp.eq.s32.totalorder %s26, 0
      %p67 = por %p65, %p66
      %s69 = sadd.s32 %s68, 1
      %p72 = scmp.eq.s32.totalorder %s20, 3
      %p73 = scmp.ne.s32.totalorder %s68, %s70
      %p74 = scmp.eq.s32.totalorder %s20, 0
      %p75 = por %p73, %p74
      %p76 = scmp.ne.s32.totalorder %s68, %s70
      %p77 = scmp.eq.s32.totalorder %s25, 3
      %p78 = por %p76, %p77
      %p79 = scmp.ne.s32.totalorder %s70, %s71
      %p80 = scmp.eq.s32.totalorder %s25, 0
      %p81 = por %p79, %p80
      %p82 = scmp.ne.s32.totalorder %s70, %s71
      %p83 = scmp.eq.s32.totalorder %s26, 3
      %p84 = por %p82, %p83
      %p86 = scmp.ne.s32.totalorder %s71, %s85
      %p87 = scmp.eq.s32.totalorder %s26, 0
      %p88 = por %p86, %p87
      %s89 = ssub.s32 %s27, %s46
      %s90 = ssub.s32 %s28, %s42
      %s91 = sor.u32 %s89, %s90
      %s92 = ssub.s32 %s29, %s38
      %s93 = sor.u32 %s91, %s92
      %p94 = scmp.eq.s32.totalorder %s93, 0
      %s96 = sadd.s32 %s95, 1
      %s97 = scalar_select %p94, %s95, %s96
      %p100 = pneg %p94
      %p101 = scmp.eq.s32.totalorder %s20, 3
      %p102 = por %p100, %p101
      %p103 = scmp.ne.s32.totalorder %s95, %s98
      %p104 = scmp.eq.s32.totalorder %s20, 0
      %p105 = por %p103, %p104
      %p106 = scmp.ne.s32.totalorder %s95, %s98
      %p107 = scmp.eq.s32.totalorder %s25, 3
      %p108 = por %p106, %p107
      %p109 = scmp.ne.s32.totalorder %s98, %s99
      %p110 = scmp.eq.s32.totalorder %s25, 0
      %p111 = por %p109, %p110
      %p112 = scmp.ne.s32.totalorder %s98, %s99
      %p113 = scmp.eq.s32.totalorder %s26, 3
      %p114 = por %p112, %p113
      %p116 = scmp.ne.s32.totalorder %s99, %s115
      %p117 = scmp.eq.s32.totalorder %s26, 0
      %p118 = por %p116, %p117
      %s119 = ssub.s32 %s27, %s46
      %s120 = ssub.s32 %s28, %s42
      %s121 = sor.u32 %s119, %s120
      %s122 = ssub.s32 %s29, %s38
      %s123 = sor.u32 %s121, %s122
      %p124 = scmp.eq.s32.totalorder %s123, 0
      %s126 = sadd.s32 %s125, 1
      %s127 = scalar_select %p124, %s125, %s126
      %p130 = pneg %p124
      %p131 = scmp.eq.s32.totalorder %s20, 3
      %p132 = por %p130, %p131
      %p133 = scmp.ne.s32.totalorder %s125, %s128
      %p134 = scmp.eq.s32.totalorder %s20, 0
      %p135 = por %p133, %p134
      %p136 = scmp.ne.s32.totalorder %s125, %s128
      %p137 = scmp.eq.s32.totalorder %s25, 3
      %p138 = por %p136, %p137
      %p139 = scmp.ne.s32.totalorder %s128, %s129
      %p140 = scmp.eq.s32.totalorder %s25, 0
      %p141 = por %p139, %p140
      %p142 = scmp.ne.s32.totalorder %s128, %s129
      %p143 = scmp.eq.s32.totalorder %s26, 3
      %p144 = por %p142, %p143
      %p146 = scmp.ne.s32.totalorder %s129, %s145
      %p147 = scmp.eq.s32.totalorder %s26, 0
      %p148 = por %p146, %p147
      %s149 = ssub.s32 %s27, %s46
      %s150 = ssub.s32 %s28, %s42
      %s151 = sor.u32 %s149, %s150
      %s152 = ssub.s32 %s29, %s38
      %s153 = sor.u32 %s151, %s152
      %p154 = scmp.eq.s32.totalorder %s153, 0
      %s156 = sadd.s32 %s155, 1
      %s157 = scalar_select %p154, %s155, %s156
      %p160 = pneg %p154
      %p161 = scmp.eq.s32.totalorder %s20, 3
      %p162 = por %p160, %p161
      %p163 = scmp.ne.s32.totalorder %s155, %s158
      %p164 = scmp.eq.s32.totalorder %s20, 0
      %p165 = por %p163, %p164
      %p166 = scmp.ne.s32.totalorder %s155, %s158
      %p167 = scmp.eq.s32.totalorder %s25, 3
      %p168 = por %p166, %p167
      %p169 = scmp.ne.s32.totalorder %s158, %s159
      %p170 = scmp.eq.s32.totalorder %s25, 0
      %p171 = por %p169, %p170
      %p172 = scmp.ne.s32.totalorder %s158, %s159
      %p173 = scmp.eq.s32.totalorder %s26, 3
      %p174 = por %p172, %p173
      %p176 = scmp.ne.s32.totalorder %s159, %s175
      %p177 = scmp.eq.s32.totalorder %s26, 0
      %p178 = por %p176, %p177
      %s179 = ssub.s32 %s27, %s46
      %s180 = ssub.s32 %s28, %s42
      %s181 = sor.u32 %s179, %s180
      %s182 = ssub.s32 %s29, %s38
      %s183 = sor.u32 %s181, %s182
      %p184 = scmp.eq.s32.totalorder %s183, 0
      %s186 = sadd.s32 %s185, 1
      %s187 = scalar_select %p184, %s185, %s186
      %p190 = pneg %p184
      %p191 = scmp.eq.s32.totalorder %s20, 3
      %p192 = por %p190, %p191
      %p193 = scmp.ne.s32.totalorder %s185, %s188
      %p194 = scmp.eq.s32.totalorder %s20, 0
      %p195 = por %p193, %p194
      %p196 = scmp.ne.s32.totalorder %s185, %s188
      %p197 = scmp.eq.s32.totalorder %s25, 3
      %p198 = por %p196, %p197
      %p199 = scmp.ne.s32.totalorder %s188, %s189
      %p200 = scmp.eq.s32.totalorder %s25, 0
      %p201 = por %p199, %p200
      %p202 = scmp.ne.s32.totalorder %s188, %s189
      %p203 = scmp.eq.s32.totalorder %s26, 3
      %p204 = por %p202, %p203
      %p206 = scmp.ne.s32.totalorder %s189, %s205
      %p207 = scmp.eq.s32.totalorder %s26, 0
      %p208 = por %p206, %p207
      %p209 = scmp.le.s32.totalorder 1, %s20
      %p210 = scmp.lt.s32.totalorder %s20, 5
      %p211 = pnand %p209, %p210
      %p212 = pneg %p211
      // Predicated region
      $region9: #{tpu_custom_call.1} parent=5 // pred_check
        _
      $region10: #{tpu_custom_call.1} parent=5 // pred_check_branch
        %214 = sbr.rel (%p211) target = $region12
      $region11: #{tpu_custom_call.1} parent=5 // pred_region
        %s215 = ssub.s32 %s20, 1
        // Predicated region
        $region13: #{tpu_custom_call.1} parent=11 // pred_check
          %p216 = pneg %p60
        $region14: #{tpu_custom_call.1} parent=11 // pred_check_branch
          %218 = sbr.rel (%p216) target = $region16
        $region15: #{tpu_custom_call.1} parent=11 // pred_region
          %s220 = ssub.s32 6144, 6144
          %221 = vsyncadd [#allocation3], %s220
          %s222 = sshll.u32 [#allocation2], 4
          %s223 = int_to_ptr.vmem [resolvable:$true] %s222
          %228 = dma.hbm_to_vmem [thread:$0]  %s0, 6144, %s223, [#allocation3], 128, 128, 8
        $region16: #{tpu_custom_call.1} parent=11 // pred_fallthru
          _
        // Predicated region
        $region17: #{tpu_custom_call.1} parent=11 // pred_check
          %p229 = pneg %p81
        $region18: #{tpu_custom_call.1} parent=11 // pred_check_branch
          %231 = sbr.rel (%p229) target = $region20
        $region19: #{tpu_custom_call.1} parent=11 // pred_region
          %s233 = ssub.s32 64, 64
          %234 = vsyncadd [#allocation6], %s233
          %s236 = sshll.u32 [#allocation5], 4
          %s237 = int_to_ptr.vmem [resolvable:$true] %s236
          %239 = dma.hbm_to_vmem [thread:$0]  %s1, 64, %s237, [#allocation6]
        $region20: #{tpu_custom_call.1} parent=11 // pred_fallthru
          _
      $region12: #{tpu_custom_call.1} parent=5 // pred_fallthru
        _
      %p240 = scmp.lt.s32.totalorder %s20, 4
      // Predicated region
      $region21: #{tpu_custom_call.1} parent=5 // pred_check
        %p241 = pneg %p240
      $region22: #{tpu_custom_call.1} parent=5 // pred_check_branch
        %243 = sbr.rel (%p241) target = $region24
      $region23: #{tpu_custom_call.1} parent=5 // pred_region
        // Predicated region
        $region25: #{tpu_custom_call.1} parent=23 // pred_check
          %p244 = pneg %p105
        $region26: #{tpu_custom_call.1} parent=23 // pred_check_branch
          %246 = sbr.rel (%p244) target = $region28
        $region27: #{tpu_custom_call.1} parent=23 // pred_region
          %s247 = sand.u32 %s20, 1
          %s248 = scalar_lea.sflag [#allocation3], %s247
          %s249 = sand.u32 %s95, 1
          %s250 = smul.addr %s249, 96
          %s251 = scalar_lea.vmem [#allocation7], %s250
          %s252 = smul.u32 2, %s28
          %s253 = smul.u32 6, %s29
          %s255 = ssub.s32 1536, 1536
          %256 = vsyncadd %s248, %s255
          %s257 = smul.addr %s252, 6
          %s258 = sadd.s32 %s253, %s257
          %s259 = smul.addr %s27, 24
          %s260 = sadd.s32 %s258, %s259
          %s261 = smul.addr %s260, 128
          %s262 = scalar_lea.hbm %s2, %s261
          %s263 = sshll.u32 %s251, 4
          %s264 = int_to_ptr.vmem [resolvable:$true] %s263
          %269 = dma.hbm_to_vmem [thread:$0]  %s262, 1536, %s264, %s248, 768, 768, 48
        $region28: #{tpu_custom_call.1} parent=23 // pred_fallthru
          _
      $region24: #{tpu_custom_call.1} parent=5 // pred_fallthru
        _
      %p270 = scmp.le.s32.totalorder 1, %s20
      %p271 = scmp.lt.s32.totalorder %s20, 5
      %p272 = pnand %p270, %p271
      %p273 = pneg %p272
      // Predicated region
      $region29: #{tpu_custom_call.1} parent=5 // pred_check
        _
      $region30: #{tpu_custom_call.1} parent=5 // pred_check_branch
        %275 = sbr.rel (%p272) target = $region32
      $region31: #{tpu_custom_call.1} parent=5 // pred_region
        %s276 = ssub.s32 %s20, 1
        // Predicated region
        $region33: #{tpu_custom_call.1} parent=31 // pred_check
          %p277 = pneg %p60
        $region34: #{tpu_custom_call.1} parent=31 // pred_check_branch
          %279 = sbr.rel (%p277) target = $region36
        $region35: #{tpu_custom_call.1} parent=31 // pred_region
          %280 = dma.done [#allocation3], 6144
        $region36: #{tpu_custom_call.1} parent=31 // pred_fallthru
          _
        // Predicated region
        $region37: #{tpu_custom_call.1} parent=31 // pred_check
          %p281 = pneg %p81
        $region38: #{tpu_custom_call.1} parent=31 // pred_check_branch
          %283 = sbr.rel (%p281) target = $region40
        $region39: #{tpu_custom_call.1} parent=31 // pred_region
          %284 = dma.done [#allocation6], 64
        $region40: #{tpu_custom_call.1} parent=31 // pred_fallthru
          _
        %s285 = sand.u32 %s25, 1
        %s286 = scalar_lea.sflag [#allocation3], %s285
        %s287 = sand.u32 %s98, 1
        %s288 = smul.addr %s287, 96
        %s289 = scalar_lea.vmem [#allocation7], %s288
        // Predicated region
        $region41: #{tpu_custom_call.1} parent=31 // pred_check
          %p290 = pneg %p111
        $region42: #{tpu_custom_call.1} parent=31 // pred_check_branch
          %292 = sbr.rel (%p290) target = $region44
        $region43: #{tpu_custom_call.1} parent=31 // pred_region
          %293 = dma.done %s286, 1536
        $region44: #{tpu_custom_call.1} parent=31 // pred_fallthru
          _
        %p294 = pneg %p60
        %p295 = pneg %p57
        %p296 = pneg %p81
        %p297 = pneg %p78
        %s298 = sand.u32 %s25, 1
        %s299 = scalar_lea.sflag [#allocation3], %s298
        %s300 = sand.u32 %s98, 1
        %s301 = smul.addr %s300, 96
        %s302 = scalar_lea.vmem [#allocation7], %s301
        %p303 = pneg %p111
        %p304 = pneg %p108
        %p305 = pneg %p141
        %p306 = pneg %p138
        %s307 = sand.u32 %s128, 1
        %s308 = scalar_lea.sflag [#allocation4], %s307
        %s309 = sand.u32 %s128, 1
        %s310 = smul.addr %s309, 32
        %s311 = scalar_lea.vmem [#allocation8], %s310
        %p312 = pneg %p171
        %p313 = pneg %p168
        %s314 = sand.u32 %s25, 1
        %s315 = scalar_lea.sflag [#allocation10], %s314
        %s316 = sand.u32 %s158, 1
        %s317 = smul.addr %s316, 8
        %s318 = scalar_lea.vmem [#allocation9], %s317
        %p319 = pneg %p201
        %p320 = pneg %p198
        %s321 = sand.u32 %s25, 1
        %s322 = scalar_lea.sflag [#allocation10], %s321
        %s323 = sand.u32 %s188, 1
        %s324 = smul.addr %s323, 8
        %s325 = scalar_lea.vmem [#allocation11], %s324
        %s326 = smul.u32 2, %s31
        %s327 = smul.u32 6, %s32
        %s328 = smul.u32 2, %s31
        %s329 = smul.u32 2, %s32
        %v331 = vld [vmem:[%s289] sm:$0xff]
        %v332 = vld [vmem:[%s289 + $0x8] sm:$0xff]
        %v333 = vld [vmem:[%s289 + $0x10] sm:$0xff]
        %v334 = vld [vmem:[%s289 + $0x30] sm:$0xff]
        %v335 = vld [vmem:[%s289 + $0x38] sm:$0xff]
        %v336 = vld [vmem:[%s289 + $0x40] sm:$0xff]
        %v337 = vpack.c.bf16 %v334, %v331
        %v338 = vpack.c.bf16 %v335, %v332
        %v339 = vpack.c.bf16 %v336, %v333
        %v340 = vld [vmem:[#allocation2] sm:$0xff]
        %v341 = vld [vmem:[#allocation2 + $0x8] sm:$0xff]
        %v342 = vld [vmem:[#allocation2 + $0x10] sm:$0xff]
        %v343 = vld [vmem:[#allocation2 + $0x18] sm:$0xff]
        %v344 = vld [vmem:[#allocation2 + $0x20] sm:$0xff]
        %v345 = vld [vmem:[#allocation2 + $0x28] sm:$0xff]
        %v346 = vld [vmem:[#allocation2 + $0x30] sm:$0xff]
        %v347 = vld [vmem:[#allocation2 + $0x38] sm:$0xff]
        %v348 = vld [vmem:[#allocation2 + $0x40] sm:$0xff]
        %v349 = vld [vmem:[#allocation2 + $0x48] sm:$0xff]
        %v350 = vld [vmem:[#allocation2 + $0x50] sm:$0xff]
        %v351 = vld [vmem:[#allocation2 + $0x58] sm:$0xff]
        %v352 = vld [vmem:[#allocation2 + $0x60] sm:$0xff]
        %v353 = vld [vmem:[#allocation2 + $0x68] sm:$0xff]
        %v354 = vld [vmem:[#allocation2 + $0x70] sm:$0xff]
        %v355 = vld [vmem:[#allocation2 + $0x78] sm:$0xff]
        %v356 = vld [vmem:[#allocation2 + $0x80] sm:$0xff]
        %v357 = vld [vmem:[#allocation2 + $0x88] sm:$0xff]
        %v358 = vld [vmem:[#allocation2 + $0x90] sm:$0xff]
        %v359 = vld [vmem:[#allocation2 + $0x98] sm:$0xff]
        %v360 = vld [vmem:[#allocation2 + $0xa0] sm:$0xff]
        %v361 = vld [vmem:[#allocation2 + $0xa8] sm:$0xff]
        %v362 = vld [vmem:[#allocation2 + $0xb0] sm:$0xff]
        %v363 = vld [vmem:[#allocation2 + $0xb8] sm:$0xff]
        %v364 = vld [vmem:[#allocation2 + $0xc0] sm:$0xff]
        %v365 = vld [vmem:[#allocation2 + $0xc8] sm:$0xff]
        %v366 = vld [vmem:[#allocation2 + $0xd0] sm:$0xff]
        %v367 = vld [vmem:[#allocation2 + $0xd8] sm:$0xff]
        %v368 = vld [vmem:[#allocation2 + $0xe0] sm:$0xff]
        %v369 = vld [vmem:[#allocation2 + $0xe8] sm:$0xff]
        %v370 = vld [vmem:[#allocation2 + $0xf0] sm:$0xff]
        %v371 = vld [vmem:[#allocation2 + $0xf8] sm:$0xff]
        %v372 = vld [vmem:[#allocation2 + $0x100] sm:$0xff]
        %v373 = vld [vmem:[#allocation2 + $0x108] sm:$0xff]
        %v374 = vld [vmem:[#allocation2 + $0x110] sm:$0xff]
        %v375 = vld [vmem:[#allocation2 + $0x118] sm:$0xff]
        %v376 = vld [vmem:[#allocation2 + $0x120] sm:$0xff]
        %v377 = vld [vmem:[#allocation2 + $0x128] sm:$0xff]
        %v378 = vld [vmem:[#allocation2 + $0x130] sm:$0xff]
        %v379 = vld [vmem:[#allocation2 + $0x138] sm:$0xff]
        %v380 = vld [vmem:[#allocation2 + $0x140] sm:$0xff]
        %v381 = vld [vmem:[#allocation2 + $0x148] sm:$0xff]
        %v382 = vld [vmem:[#allocation2 + $0x150] sm:$0xff]
        %v383 = vld [vmem:[#allocation2 + $0x158] sm:$0xff]
        %v384 = vld [vmem:[#allocation2 + $0x160] sm:$0xff]
        %v385 = vld [vmem:[#allocation2 + $0x168] sm:$0xff]
        %v386 = vld [vmem:[#allocation2 + $0x170] sm:$0xff]
        %v387 = vld [vmem:[#allocation2 + $0x178] sm:$0xff]
        %v436 = vunpack.c.l.b16 %v340
        %v437 = vunpack.c.h.b16 %v340
        %v438 = vunpack.c.l.b16 %v341
        %v439 = vunpack.c.h.b16 %v341
        %v440 = vunpack.c.l.b16 %v342
        %v441 = vunpack.c.h.b16 %v342
        %v442 = vunpack.c.l.b16 %v343
        %v443 = vunpack.c.h.b16 %v343
        %v444 = vunpack.c.l.b16 %v344
        %v445 = vunpack.c.h.b16 %v344
        %v446 = vunpack.c.l.b16 %v345
        %v447 = vunpack.c.h.b16 %v345
        %v448 = vunpack.c.l.b16 %v346
        %v449 = vunpack.c.h.b16 %v346
        %v450 = vunpack.c.l.b16 %v347
        %v451 = vunpack.c.h.b16 %v347
        %v452 = vunpack.c.l.b16 %v348
        %v453 = vunpack.c.h.b16 %v348
        %v454 = vunpack.c.l.b16 %v349
        %v455 = vunpack.c.h.b16 %v349
        %v456 = vunpack.c.l.b16 %v350
        %v457 = vunpack.c.h.b16 %v350
        %v458 = vunpack.c.l.b16 %v351
        %v459 = vunpack.c.h.b16 %v351
        %v460 = vunpack.c.l.b16 %v352
        %v461 = vunpack.c.h.b16 %v352
        %v462 = vunpack.c.l.b16 %v353
        %v463 = vunpack.c.h.b16 %v353
        %v464 = vunpack.c.l.b16 %v354
        %v465 = vunpack.c.h.b16 %v354
        %v466 = vunpack.c.l.b16 %v355
        %v467 = vunpack.c.h.b16 %v355
        %v468 = vunpack.c.l.b16 %v356
        %v469 = vunpack.c.h.b16 %v356
        %v470 = vunpack.c.l.b16 %v357
        %v471 = vunpack.c.h.b16 %v357
        %v472 = vunpack.c.l.b16 %v358
        %v473 = vunpack.c.h.b16 %v358
        %v474 = vunpack.c.l.b16 %v359
        %v475 = vunpack.c.h.b16 %v359
        %v476 = vunpack.c.l.b16 %v360
        %v477 = vunpack.c.h.b16 %v360
        %v478 = vunpack.c.l.b16 %v361
        %v479 = vunpack.c.h.b16 %v361
        %v480 = vunpack.c.l.b16 %v362
        %v481 = vunpack.c.h.b16 %v362
        %v482 = vunpack.c.l.b16 %v363
        %v483 = vunpack.c.h.b16 %v363
        %v484 = vunpack.c.l.b16 %v364
        %v485 = vunpack.c.h.b16 %v364
        %v486 = vunpack.c.l.b16 %v365
        %v487 = vunpack.c.h.b16 %v365
        %v488 = vunpack.c.l.b16 %v366
        %v489 = vunpack.c.h.b16 %v366
        %v490 = vunpack.c.l.b16 %v367
        %v491 = vunpack.c.h.b16 %v367
        %v492 = vunpack.c.l.b16 %v368
        %v493 = vunpack.c.h.b16 %v368
        %v494 = vunpack.c.l.b16 %v369
        %v495 = vunpack.c.h.b16 %v369
        %v496 = vunpack.c.l.b16 %v370
        %v497 = vunpack.c.h.b16 %v370
        %v498 = vunpack.c.l.b16 %v371
        %v499 = vunpack.c.h.b16 %v371
        %v500 = vunpack.c.l.b16 %v372
        %v501 = vunpack.c.h.b16 %v372
        %v502 = vunpack.c.l.b16 %v373
        %v503 = vunpack.c.h.b16 %v373
        %v504 = vunpack.c.l.b16 %v374
        %v505 = vunpack.c.h.b16 %v374
        %v506 = vunpack.c.l.b16 %v375
        %v507 = vunpack.c.h.b16 %v375
        %v508 = vunpack.c.l.b16 %v376
        %v509 = vunpack.c.h.b16 %v376
        %v510 = vunpack.c.l.b16 %v377
        %v511 = vunpack.c.h.b16 %v377
        %v512 = vunpack.c.l.b16 %v378
        %v513 = vunpack.c.h.b16 %v378
        %v514 = vunpack.c.l.b16 %v379
        %v515 = vunpack.c.h.b16 %v379
        %v516 = vunpack.c.l.b16 %v380
        %v517 = vunpack.c.h.b16 %v380
        %v518 = vunpack.c.l.b16 %v381
        %v519 = vunpack.c.h.b16 %v381
        %v520 = vunpack.c.l.b16 %v382
        %v521 = vunpack.c.h.b16 %v382
        %v522 = vunpack.c.l.b16 %v383
        %v523 = vunpack.c.h.b16 %v383
        %v524 = vunpack.c.l.b16 %v384
        %v525 = vunpack.c.h.b16 %v384
        %v526 = vunpack.c.l.b16 %v385
        %v527 = vunpack.c.h.b16 %v385
        %v528 = vunpack.c.l.b16 %v386
        %v529 = vunpack.c.h.b16 %v386
        %v530 = vunpack.c.l.b16 %v387
        %v531 = vunpack.c.h.b16 %v387
        %v532 = vpack.c.b16 %v438, %v436
        %v533 = vpack.c.b16 %v439, %v437
        %v534 = vpack.c.b16 %v442, %v440
        %v535 = vpack.c.b16 %v443, %v441
        %v536 = vpack.c.b16 %v446, %v444
        %v537 = vpack.c.b16 %v447, %v445
        %v538 = vpack.c.b16 %v450, %v448
        %v539 = vpack.c.b16 %v451, %v449
        %v540 = vpack.c.b16 %v454, %v452
        %v541 = vpack.c.b16 %v455, %v453
        %v542 = vpack.c.b16 %v458, %v456
        %v543 = vpack.c.b16 %v459, %v457
        %v544 = vpack.c.b16 %v462, %v460
        %v545 = vpack.c.b16 %v463, %v461
        %v546 = vpack.c.b16 %v466, %v464
        %v547 = vpack.c.b16 %v467, %v465
        %v548 = vpack.c.b16 %v470, %v468
        %v549 = vpack.c.b16 %v471, %v469
        %v550 = vpack.c.b16 %v474, %v472
        %v551 = vpack.c.b16 %v475, %v473
        %v552 = vpack.c.b16 %v478, %v476
        %v553 = vpack.c.b16 %v479, %v477
        %v554 = vpack.c.b16 %v482, %v480
        %v555 = vpack.c.b16 %v483, %v481
        %v556 = vpack.c.b16 %v486, %v484
        %v557 = vpack.c.b16 %v487, %v485
        %v558 = vpack.c.b16 %v490, %v488
        %v559 = vpack.c.b16 %v491, %v489
        %v560 = vpack.c.b16 %v494, %v492
        %v561 = vpack.c.b16 %v495, %v493
        %v562 = vpack.c.b16 %v498, %v496
        %v563 = vpack.c.b16 %v499, %v497
        %v564 = vpack.c.b16 %v502, %v500
        %v565 = vpack.c.b16 %v503, %v501
        %v566 = vpack.c.b16 %v506, %v504
        %v567 = vpack.c.b16 %v507, %v505
        %v568 = vpack.c.b16 %v510, %v508
        %v569 = vpack.c.b16 %v511, %v509
        %v570 = vpack.c.b16 %v514, %v512
        %v571 = vpack.c.b16 %v515, %v513
        %v572 = vpack.c.b16 %v518, %v516
        %v573 = vpack.c.b16 %v519, %v517
        %v574 = vpack.c.b16 %v522, %v520
        %v575 = vpack.c.b16 %v523, %v521
        %v576 = vpack.c.b16 %v526, %v524
        %v577 = vpack.c.b16 %v527, %v525
        %v578 = vpack.c.b16 %v530, %v528
        %v579 = vpack.c.b16 %v531, %v529
        %628 = vmatprep.subr.bf16.mxu0 %v533
        %629 = vmatpush1.bf16.msra.mxu0 %v532
        %630 = vmatprep.subr.bf16.mxu0 %v535
        %631 = vmatpush1.bf16.msra.mxu0 %v534
        %632 = vmatprep.subr.bf16.mxu0 %v537
        %633 = vmatpush1.bf16.msra.mxu0 %v536
        %634 = vmatprep.subr.bf16.mxu0 %v539
        %635 = vmatpush1.bf16.msra.mxu0 %v538
        %636 = vmatprep.subr.bf16.mxu0 %v541
        %637 = vmatpush1.bf16.msra.mxu0 %v540
        %638 = vmatprep.subr.bf16.mxu0 %v543
        %639 = vmatpush1.bf16.msra.mxu0 %v542
        %640 = vmatprep.subr.bf16.mxu0 %v545
        %641 = vmatpush1.bf16.msra.mxu0 %v544
        %642 = vmatprep.subr.bf16.mxu0 %v547
        %643 = vmatpush1.bf16.msra.mxu0 %v546
        %644 = vmatprep.subr.bf16.mxu0 %v549
        %645 = vmatpush1.bf16.msra.mxu0 %v548
        %646 = vmatprep.subr.bf16.mxu0 %v551
        %647 = vmatpush1.bf16.msra.mxu0 %v550
        %648 = vmatprep.subr.bf16.mxu0 %v553
        %649 = vmatpush1.bf16.msra.mxu0 %v552
        %650 = vmatprep.subr.bf16.mxu0 %v555
        %651 = vmatpush1.bf16.msra.mxu0 %v554
        %652 = vmatprep.subr.bf16.mxu0 %v557
        %653 = vmatpush1.bf16.msra.mxu0 %v556
        %654 = vmatprep.subr.bf16.mxu0 %v559
        %655 = vmatpush1.bf16.msra.mxu0 %v558
        %656 = vmatprep.subr.bf16.mxu0 %v561
        %657 = vmatpush1.bf16.msra.mxu0 %v560
        %658 = vmatprep.subr.bf16.mxu0 %v563
        %659 = vmatpush1.bf16.msra.mxu0 %v562
        %660 = vmatprep.mubr.bf16.mxu0 %v338
        %661 = vmatmul.mubr.bf16.gmra.mrb[0].mxu0 %v337
        %v662 = vpop.f32.mrb[0].mxu0
        %v663 = vadd.f32 0.0, %v662
        %v664 = vpop.f32.mrb[0].mxu0
        %v665 = vadd.f32 0.0, %v664
        %v666 = vpop.f32.mrb[0].mxu0
        %v667 = vadd.f32 0.0, %v666
        %v668 = vpop.f32.mrb[0].mxu0
        %v669 = vadd.f32 0.0, %v668
        %670 = vdwg.mxu0
        %671 = vmatprep.subr.bf16.mxu0 %v565
        %672 = vmatpush1.bf16.msra.mxu0 %v564
        %673 = vmatprep.subr.bf16.mxu0 %v567
        %674 = vmatpush1.bf16.msra.mxu0 %v566
        %675 = vmatprep.subr.bf16.mxu0 %v569
        %676 = vmatpush1.bf16.msra.mxu0 %v568
        %677 = vmatprep.subr.bf16.mxu0 %v571
        %678 = vmatpush1.bf16.msra.mxu0 %v570
        %679 = vmatprep.subr.bf16.mxu0 %v573
        %680 = vmatpush1.bf16.msra.mxu0 %v572
        %681 = vmatprep.subr.bf16.mxu0 %v575
        %682 = vmatpush1.bf16.msra.mxu0 %v574
        %683 = vmatprep.subr.bf16.mxu0 %v577
        %684 = vmatpush1.bf16.msra.mxu0 %v576
        %685 = vmatprep.subr.bf16.mxu0 %v579
        %686 = vmatpush1.bf16.msra.mxu0 %v578
        %687 = vmatprep.subr.bf16.mxu0 0
        %688 = vmatpush1.bf16.msra.mxu0 0
        %689 = vmatprep.subr.bf16.mxu0 0
        %690 = vmatpush1.bf16.msra.mxu0 0
        %691 = vmatprep.subr.bf16.mxu0 0
        %692 = vmatpush1.bf16.msra.mxu0 0
        %693 = vmatprep.subr.bf16.mxu0 0
        %694 = vmatpush1.bf16.msra.mxu0 0
        %695 = vmatprep.subr.bf16.mxu0 0
        %696 = vmatpush1.bf16.msra.mxu0 0
        %697 = vmatprep.subr.bf16.mxu0 0
        %698 = vmatpush1.bf16.msra.mxu0 0
        %699 = vmatprep.subr.bf16.mxu0 0
        %700 = vmatpush1.bf16.msra.mxu0 0
        %701 = vmatprep.subr.bf16.mxu0 0
        %702 = vmatpush1.bf16.msra.mxu0 0
        %703 = vmatprep.mubr.bf16.mxu0 0
        %704 = vmatmul.mubr.bf16.gmra.mrb[0].mxu0 %v339
        %v705 = vpop.f32.mrb[0].mxu0
        %v706 = vadd.f32 %v663, %v705
        %v707 = vpop.f32.mrb[0].mxu0
        %v708 = vadd.f32 %v665, %v707
        %v709 = vpop.f32.mrb[0].mxu0
        %v710 = vadd.f32 %v667, %v709
        %v711 = vpop.f32.mrb[0].mxu0
        %v712 = vadd.f32 %v669, %v711
        %713 = vdwg.mxu0
        %714 = vst [vmem:[%s311] sm:$0xff] %v706
        %715 = vst [vmem:[%s311 + $0x10] sm:$0xff] %v710
        %v716 = vld [vmem:[%s289 + $0x18] sm:$0xff]
        %v717 = vld [vmem:[%s289 + $0x20] sm:$0xff]
        %v718 = vld [vmem:[%s289 + $0x28] sm:$0xff]
        %v719 = vld [vmem:[%s289 + $0x48] sm:$0xff]
        %v720 = vld [vmem:[%s289 + $0x50] sm:$0xff]
        %v721 = vld [vmem:[%s289 + $0x58] sm:$0xff]
        %v722 = vpack.c.bf16 %v719, %v716
        %v723 = vpack.c.bf16 %v720, %v717
        %v724 = vpack.c.bf16 %v721, %v718
        %v725 = vld [vmem:[#allocation2] sm:$0xff]
        %v726 = vld [vmem:[#allocation2 + $0x8] sm:$0xff]
        %v727 = vld [vmem:[#allocation2 + $0x10] sm:$0xff]
        %v728 = vld [vmem:[#allocation2 + $0x18] sm:$0xff]
        %v729 = vld [vmem:[#allocation2 + $0x20] sm:$0xff]
        %v730 = vld [vmem:[#allocation2 + $0x28] sm:$0xff]
        %v731 = vld [vmem:[#allocation2 + $0x30] sm:$0xff]
        %v732 = vld [vmem:[#allocation2 + $0x38] sm:$0xff]
        %v733 = vld [vmem:[#allocation2 + $0x40] sm:$0xff]
        %v734 = vld [vmem:[#allocation2 + $0x48] sm:$0xff]
        %v735 = vld [vmem:[#allocation2 + $0x50] sm:$0xff]
        %v736 = vld [vmem:[#allocation2 + $0x58] sm:$0xff]
        %v737 = vld [vmem:[#allocation2 + $0x60] sm:$0xff]
        %v738 = vld [vmem:[#allocation2 + $0x68] sm:$0xff]
        %v739 = vld [vmem:[#allocation2 + $0x70] sm:$0xff]
        %v740 = vld [vmem:[#allocation2 + $0x78] sm:$0xff]
        %v741 = vld [vmem:[#allocation2 + $0x80] sm:$0xff]
        %v742 = vld [vmem:[#allocation2 + $0x88] sm:$0xff]
        %v743 = vld [vmem:[#allocation2 + $0x90] sm:$0xff]
        %v744 = vld [vmem:[#allocation2 + $0x98] sm:$0xff]
        %v745 = vld [vmem:[#allocation2 + $0xa0] sm:$0xff]
        %v746 = vld [vmem:[#allocation2 + $0xa8] sm:$0xff]
        %v747 = vld [vmem:[#allocation2 + $0xb0] sm:$0xff]
        %v748 = vld [vmem:[#allocation2 + $0xb8] sm:$0xff]
        %v749 = vld [vmem:[#allocation2 + $0xc0] sm:$0xff]
        %v750 = vld [vmem:[#allocation2 + $0xc8] sm:$0xff]
        %v751 = vld [vmem:[#allocation2 + $0xd0] sm:$0xff]
        %v752 = vld [vmem:[#allocation2 + $0xd8] sm:$0xff]
        %v753 = vld [vmem:[#allocation2 + $0xe0] sm:$0xff]
        %v754 = vld [vmem:[#allocation2 + $0xe8] sm:$0xff]
        %v755 = vld [vmem:[#allocation2 + $0xf0] sm:$0xff]
        %v756 = vld [vmem:[#allocation2 + $0xf8] sm:$0xff]
        %v757 = vld [vmem:[#allocation2 + $0x100] sm:$0xff]
        %v758 = vld [vmem:[#allocation2 + $0x108] sm:$0xff]
        %v759 = vld [vmem:[#allocation2 + $0x110] sm:$0xff]
        %v760 = vld [vmem:[#allocation2 + $0x118] sm:$0xff]
        %v761 = vld [vmem:[#allocation2 + $0x120] sm:$0xff]
        %v762 = vld [vmem:[#allocation2 + $0x128] sm:$0xff]
        %v763 = vld [vmem:[#allocation2 + $0x130] sm:$0xff]
        %v764 = vld [vmem:[#allocation2 + $0x138] sm:$0xff]
        %v765 = vld [vmem:[#allocation2 + $0x140] sm:$0xff]
        %v766 = vld [vmem:[#allocation2 + $0x148] sm:$0xff]
        %v767 = vld [vmem:[#allocation2 + $0x150] sm:$0xff]
        %v768 = vld [vmem:[#allocation2 + $0x158] sm:$0xff]
        %v769 = vld [vmem:[#allocation2 + $0x160] sm:$0xff]
        %v770 = vld [vmem:[#allocation2 + $0x168] sm:$0xff]
        %v771 = vld [vmem:[#allocation2 + $0x170] sm:$0xff]
        %v772 = vld [vmem:[#allocation2 + $0x178] sm:$0xff]
        %v821 = vunpack.c.l.b16 %v725
        %v822 = vunpack.c.h.b16 %v725
        %v823 = vunpack.c.l.b16 %v726
        %v824 = vunpack.c.h.b16 %v726
        %v825 = vunpack.c.l.b16 %v727
        %v826 = vunpack.c.h.b16 %v727
        %v827 = vunpack.c.l.b16 %v728
        %v828 = vunpack.c.h.b16 %v728
        %v829 = vunpack.c.l.b16 %v729
        %v830 = vunpack.c.h.b16 %v729
        %v831 = vunpack.c.l.b16 %v730
        %v832 = vunpack.c.h.b16 %v730
        %v833 = vunpack.c.l.b16 %v731
        %v834 = vunpack.c.h.b16 %v731
        %v835 = vunpack.c.l.b16 %v732
        %v836 = vunpack.c.h.b16 %v732
        %v837 = vunpack.c.l.b16 %v733
        %v838 = vunpack.c.h.b16 %v733
        %v839 = vunpack.c.l.b16 %v734
        %v840 = vunpack.c.h.b16 %v734
        %v841 = vunpack.c.l.b16 %v735
        %v842 = vunpack.c.h.b16 %v735
        %v843 = vunpack.c.l.b16 %v736
        %v844 = vunpack.c.h.b16 %v736
        %v845 = vunpack.c.l.b16 %v737
        %v846 = vunpack.c.h.b16 %v737
        %v847 = vunpack.c.l.b16 %v738
        %v848 = vunpack.c.h.b16 %v738
        %v849 = vunpack.c.l.b16 %v739
        %v850 = vunpack.c.h.b16 %v739
        %v851 = vunpack.c.l.b16 %v740
        %v852 = vunpack.c.h.b16 %v740
        %v853 = vunpack.c.l.b16 %v741
        %v854 = vunpack.c.h.b16 %v741
        %v855 = vunpack.c.l.b16 %v742
        %v856 = vunpack.c.h.b16 %v742
        %v857 = vunpack.c.l.b16 %v743
        %v858 = vunpack.c.h.b16 %v743
        %v859 = vunpack.c.l.b16 %v744
        %v860 = vunpack.c.h.b16 %v744
        %v861 = vunpack.c.l.b16 %v745
        %v862 = vunpack.c.h.b16 %v745
        %v863 = vunpack.c.l.b16 %v746
        %v864 = vunpack.c.h.b16 %v746
        %v865 = vunpack.c.l.b16 %v747
        %v866 = vunpack.c.h.b16 %v747
        %v867 = vunpack.c.l.b16 %v748
        %v868 = vunpack.c.h.b16 %v748
        %v869 = vunpack.c.l.b16 %v749
        %v870 = vunpack.c.h.b16 %v749
        %v871 = vunpack.c.l.b16 %v750
        %v872 = vunpack.c.h.b16 %v750
        %v873 = vunpack.c.l.b16 %v751
        %v874 = vunpack.c.h.b16 %v751
        %v875 = vunpack.c.l.b16 %v752
        %v876 = vunpack.c.h.b16 %v752
        %v877 = vunpack.c.l.b16 %v753
        %v878 = vunpack.c.h.b16 %v753
        %v879 = vunpack.c.l.b16 %v754
        %v880 = vunpack.c.h.b16 %v754
        %v881 = vunpack.c.l.b16 %v755
        %v882 = vunpack.c.h.b16 %v755
        %v883 = vunpack.c.l.b16 %v756
        %v884 = vunpack.c.h.b16 %v756
        %v885 = vunpack.c.l.b16 %v757
        %v886 = vunpack.c.h.b16 %v757
        %v887 = vunpack.c.l.b16 %v758
        %v888 = vunpack.c.h.b16 %v758
        %v889 = vunpack.c.l.b16 %v759
        %v890 = vunpack.c.h.b16 %v759
        %v891 = vunpack.c.l.b16 %v760
        %v892 = vunpack.c.h.b16 %v760
        %v893 = vunpack.c.l.b16 %v761
        %v894 = vunpack.c.h.b16 %v761
        %v895 = vunpack.c.l.b16 %v762
        %v896 = vunpack.c.h.b16 %v762
        %v897 = vunpack.c.l.b16 %v763
        %v898 = vunpack.c.h.b16 %v763
        %v899 = vunpack.c.l.b16 %v764
        %v900 = vunpack.c.h.b16 %v764
        %v901 = vunpack.c.l.b16 %v765
        %v902 = vunpack.c.h.b16 %v765
        %v903 = vunpack.c.l.b16 %v766
        %v904 = vunpack.c.h.b16 %v766
        %v905 = vunpack.c.l.b16 %v767
        %v906 = vunpack.c.h.b16 %v767
        %v907 = vunpack.c.l.b16 %v768
        %v908 = vunpack.c.h.b16 %v768
        %v909 = vunpack.c.l.b16 %v769
        %v910 = vunpack.c.h.b16 %v769
        %v911 = vunpack.c.l.b16 %v770
        %v912 = vunpack.c.h.b16 %v770
        %v913 = vunpack.c.l.b16 %v771
        %v914 = vunpack.c.h.b16 %v771
        %v915 = vunpack.c.l.b16 %v772
        %v916 = vunpack.c.h.b16 %v772
        %v917 = vpack.c.b16 %v823, %v821
        %v918 = vpack.c.b16 %v824, %v822
        %v919 = vpack.c.b16 %v827, %v825
        %v920 = vpack.c.b16 %v828, %v826
        %v921 = vpack.c.b16 %v831, %v829
        %v922 = vpack.c.b16 %v832, %v830
        %v923 = vpack.c.b16 %v835, %v833
        %v924 = vpack.c.b16 %v836, %v834
        %v925 = vpack.c.b16 %v839, %v837
        %v926 = vpack.c.b16 %v840, %v838
        %v927 = vpack.c.b16 %v843, %v841
        %v928 = vpack.c.b16 %v844, %v842
        %v929 = vpack.c.b16 %v847, %v845
        %v930 = vpack.c.b16 %v848, %v846
        %v931 = vpack.c.b16 %v851, %v849
        %v932 = vpack.c.b16 %v852, %v850
        %v933 = vpack.c.b16 %v855, %v853
        %v934 = vpack.c.b16 %v856, %v854
        %v935 = vpack.c.b16 %v859, %v857
        %v936 = vpack.c.b16 %v860, %v858
        %v937 = vpack.c.b16 %v863, %v861
        %v938 = vpack.c.b16 %v864, %v862
        %v939 = vpack.c.b16 %v867, %v865
        %v940 = vpack.c.b16 %v868, %v866
        %v941 = vpack.c.b16 %v871, %v869
        %v942 = vpack.c.b16 %v872, %v870
        %v943 = vpack.c.b16 %v875, %v873
        %v944 = vpack.c.b16 %v876, %v874
        %v945 = vpack.c.b16 %v879, %v877
        %v946 = vpack.c.b16 %v880, %v878
        %v947 = vpack.c.b16 %v883, %v881
        %v948 = vpack.c.b16 %v884, %v882
        %v949 = vpack.c.b16 %v887, %v885
        %v950 = vpack.c.b16 %v888, %v886
        %v951 = vpack.c.b16 %v891, %v889
        %v952 = vpack.c.b16 %v892, %v890
        %v953 = vpack.c.b16 %v895, %v893
        %v954 = vpack.c.b16 %v896, %v894
        %v955 = vpack.c.b16 %v899, %v897
        %v956 = vpack.c.b16 %v900, %v898
        %v957 = vpack.c.b16 %v903, %v901
        %v958 = vpack.c.b16 %v904, %v902
        %v959 = vpack.c.b16 %v907, %v905
        %v960 = vpack.c.b16 %v908, %v906
        %v961 = vpack.c.b16 %v911, %v909
        %v962 = vpack.c.b16 %v912, %v910
        %v963 = vpack.c.b16 %v915, %v913
        %v964 = vpack.c.b16 %v916, %v914
        %1013 = vmatprep.subr.bf16.mxu0 %v918
        %1014 = vmatpush1.bf16.msra.mxu0 %v917
        %1015 = vmatprep.subr.bf16.mxu0 %v920
        %1016 = vmatpush1.bf16.msra.mxu0 %v919
        %1017 = vmatprep.subr.bf16.mxu0 %v922
        %1018 = vmatpush1.bf16.msra.mxu0 %v921
        %1019 = vmatprep.subr.bf16.mxu0 %v924
        %1020 = vmatpush1.bf16.msra.mxu0 %v923
        %1021 = vmatprep.subr.bf16.mxu0 %v926
        %1022 = vmatpush1.bf16.msra.mxu0 %v925
        %1023 = vmatprep.subr.bf16.mxu0 %v928
        %1024 = vmatpush1.bf16.msra.mxu0 %v927
        %1025 = vmatprep.subr.bf16.mxu0 %v930
        %1026 = vmatpush1.bf16.msra.mxu0 %v929
        %1027 = vmatprep.subr.bf16.mxu0 %v932
        %1028 = vmatpush1.bf16.msra.mxu0 %v931
        %1029 = vmatprep.subr.bf16.mxu0 %v934
        %1030 = vmatpush1.bf16.msra.mxu0 %v933
        %1031 = vmatprep.subr.bf16.mxu0 %v936
        %1032 = vmatpush1.bf16.msra.mxu0 %v935
        %1033 = vmatprep.subr.bf16.mxu0 %v938
        %1034 = vmatpush1.bf16.msra.mxu0 %v937
        %1035 = vmatprep.subr.bf16.mxu0 %v940
        %1036 = vmatpush1.bf16.msra.mxu0 %v939
        %1037 = vmatprep.subr.bf16.mxu0 %v942
        %1038 = vmatpush1.bf16.msra.mxu0 %v941
        %1039 = vmatprep.subr.bf16.mxu0 %v944
        %1040 = vmatpush1.bf16.msra.mxu0 %v943
        %1041 = vmatprep.subr.bf16.mxu0 %v946
        %1042 = vmatpush1.bf16.msra.mxu0 %v945
        %1043 = vmatprep.subr.bf16.mxu0 %v948
        %1044 = vmatpush1.bf16.msra.mxu0 %v947
        %1045 = vmatprep.mubr.bf16.mxu0 %v723
        %1046 = vmatmul.mubr.bf16.gmra.mrb[0].mxu0 %v722
        %v1047 = vpop.f32.mrb[0].mxu0
        %v1048 = vadd.f32 0.0, %v1047
        %v1049 = vpop.f32.mrb[0].mxu0
        %v1050 = vadd.f32 0.0, %v1049
        %v1051 = vpop.f32.mrb[0].mxu0
        %v1052 = vadd.f32 0.0, %v1051
        %v1053 = vpop.f32.mrb[0].mxu0
        %v1054 = vadd.f32 0.0, %v1053
        %1055 = vdwg.mxu0
        %1056 = vmatprep.subr.bf16.mxu0 %v950
        %1057 = vmatpush1.bf16.msra.mxu0 %v949
        %1058 = vmatprep.subr.bf16.mxu0 %v952
        %1059 = vmatpush1.bf16.msra.mxu0 %v951
        %1060 = vmatprep.subr.bf16.mxu0 %v954
        %1061 = vmatpush1.bf16.msra.mxu0 %v953
        %1062 = vmatprep.subr.bf16.mxu0 %v956
        %1063 = vmatpush1.bf16.msra.mxu0 %v955
        %1064 = vmatprep.subr.bf16.mxu0 %v958
        %1065 = vmatpush1.bf16.msra.mxu0 %v957
        %1066 = vmatprep.subr.bf16.mxu0 %v960
        %1067 = vmatpush1.bf16.msra.mxu0 %v959
        %1068 = vmatprep.subr.bf16.mxu0 %v962
        %1069 = vmatpush1.bf16.msra.mxu0 %v961
        %1070 = vmatprep.subr.bf16.mxu0 %v964
        %1071 = vmatpush1.bf16.msra.mxu0 %v963
        %1072 = vmatprep.subr.bf16.mxu0 0
        %1073 = vmatpush1.bf16.msra.mxu0 0
        %1074 = vmatprep.subr.bf16.mxu0 0
        %1075 = vmatpush1.bf16.msra.mxu0 0
        %1076 = vmatprep.subr.bf16.mxu0 0
        %1077 = vmatpush1.bf16.msra.mxu0 0
        %1078 = vmatprep.subr.bf16.mxu0 0
        %1079 = vmatpush1.bf16.msra.mxu0 0
        %1080 = vmatprep.subr.bf16.mxu0 0
        %1081 = vmatpush1.bf16.msra.mxu0 0
        %1082 = vmatprep.subr.bf16.mxu0 0
        %1083 = vmatpush1.bf16.msra.mxu0 0
        %1084 = vmatprep.subr.bf16.mxu0 0
        %1085 = vmatpush1.bf16.msra.mxu0 0
        %1086 = vmatprep.subr.bf16.mxu0 0
        %1087 = vmatpush1.bf16.msra.mxu0 0
        %1088 = vmatprep.mubr.bf16.mxu0 0
        %1089 = vmatmul.mubr.bf16.gmra.mrb[0].mxu0 %v724
        %v1090 = vpop.f32.mrb[0].mxu0
        %v1091 = vadd.f32 %v1048, %v1090
        %v1092 = vpop.f32.mrb[0].mxu0
        %v1093 = vadd.f32 %v1050, %v1092
        %v1094 = vpop.f32.mrb[0].mxu0
        %v1095 = vadd.f32 %v1052, %v1094
        %v1096 = vpop.f32.mrb[0].mxu0
        %v1097 = vadd.f32 %v1054, %v1096
        %1098 = vdwg.mxu0
        %1099 = vst [vmem:[%s311 + $0x8] sm:$0xff] %v1091
        %1100 = vst [vmem:[%s311 + $0x18] sm:$0xff] %v1095
        %1103 = vrot.lane.b32.xlu0 %v1093, 64
        %v1104 = vpop.permute.xlu0 %1103
        %1105 = vrot.lane.b32.xlu0 %v1097, 64
        %v1106 = vpop.permute.xlu0 %1105
        %vm1109 = vcmask 523264
        %v1110 = vsel %vm1109, %v708, %v1104
        %v1111 = vsel %vm1109, %v712, %v1106
        %1114 = vrot.lane.b32.xlu0 %v708, 64
        %v1115 = vpop.permute.xlu0 %1114
        %1116 = vrot.lane.b32.xlu0 %v712, 64
        %v1117 = vpop.permute.xlu0 %1116
        %v1120 = vsel %vm1109, %v1115, %v1093
        %v1121 = vsel %vm1109, %v1117, %v1097
        %v1122 = vpack.c.bf16 %v1111, %v1110
        %v1123 = vunpack.c.l.bf16 %v1122
        %v1124 = vunpack.c.h.bf16 %v1122
        %v1125 = vsub.f32 %v1110, %v1123
        %v1126 = vsub.f32 %v1111, %v1124
        %v1127 = vpack.c.bf16 %v1126, %v1125
        %v1128 = vld [vmem:[#allocation5] sm:$0xf]
        %vm1129 = vcmask 130048
        %v1131 = vsel %vm1129, %v1128, 0
        %1133 = vmatprep.subr.bf16.mxu0 0
        %1134 = vmatpush1.bf16.msra.mxu0 %v1127
        %1135 = vmatprep.subr.bf16.mxu0 0
        %1136 = vmatpush1.bf16.msra.mxu0 0
        %1137 = vmatprep.subr.bf16.mxu0 0
        %1138 = vmatpush1.bf16.msra.mxu0 0
        %1139 = vmatprep.subr.bf16.mxu0 0
        %1140 = vmatpush1.bf16.msra.mxu0 0
        %1141 = vmatprep.subr.bf16.mxu0 0
        %1142 = vmatpush1.bf16.msra.mxu0 0
        %1143 = vmatprep.subr.bf16.mxu0 0
        %1144 = vmatpush1.bf16.msra.mxu0 0
        %1145 = vmatprep.subr.bf16.mxu0 0
        %1146 = vmatpush1.bf16.msra.mxu0 0
        %1147 = vmatprep.subr.bf16.mxu0 0
        %1148 = vmatpush1.bf16.msra.mxu0 0
        %1149 = vmatprep.subr.bf16.mxu0 0
        %1150 = vmatpush1.bf16.msra.mxu0 0
        %1151 = vmatprep.subr.bf16.mxu0 0
        %1152 = vmatpush1.bf16.msra.mxu0 0
        %1153 = vmatprep.subr.bf16.mxu0 0
        %1154 = vmatpush1.bf16.msra.mxu0 0
        %1155 = vmatprep.subr.bf16.mxu0 0
        %1156 = vmatpush1.bf16.msra.mxu0 0
        %1157 = vmatprep.subr.bf16.mxu0 0
        %1158 = vmatpush1.bf16.msra.mxu0 0
        %1159 = vmatprep.subr.bf16.mxu0 0
        %1160 = vmatpush1.bf16.msra.mxu0 0
        %1161 = vmatprep.subr.bf16.mxu0 0
        %1162 = vmatpush1.bf16.msra.mxu0 0
        %1163 = vmatprep.subr.bf16.mxu0 0
        %1164 = vmatpush1.bf16.msra.mxu0 0
        %1165 = vmatprep.mubr.bf16.mxu0 0
        %1166 = vmatmul.mubr.bf16.gmra.mrb[0].mxu0 %v1131
        %v1167 = vpop.f32.mrb[0].mxu0
        %v1168 = vadd.f32 0.0, %v1167
        %v1169 = vpop.f32.mrb[0].mxu0
        %v1170 = vpop.f32.mrb[0].mxu0
        %v1171 = vpop.f32.mrb[0].mxu0
        %1172 = vdwg.mxu0
        %1173 = vmatprep.subr.bf16.mxu0 0
        %1174 = vmatpush1.bf16.msra.mxu0 %v1122
        %1175 = vmatprep.subr.bf16.mxu0 0
        %1176 = vmatpush1.bf16.msra.mxu0 0
        %1177 = vmatprep.subr.bf16.mxu0 0
        %1178 = vmatpush1.bf16.msra.mxu0 0
        %1179 = vmatprep.subr.bf16.mxu0 0
        %1180 = vmatpush1.bf16.msra.mxu0 0
        %1181 = vmatprep.subr.bf16.mxu0 0
        %1182 = vmatpush1.bf16.msra.mxu0 0
        %1183 = vmatprep.subr.bf16.mxu0 0
        %1184 = vmatpush1.bf16.msra.mxu0 0
        %1185 = vmatprep.subr.bf16.mxu0 0
        %1186 = vmatpush1.bf16.msra.mxu0 0
        %1187 = vmatprep.subr.bf16.mxu0 0
        %1188 = vmatpush1.bf16.msra.mxu0 0
        %1189 = vmatprep.subr.bf16.mxu0 0
        %1190 = vmatpush1.bf16.msra.mxu0 0
        %1191 = vmatprep.subr.bf16.mxu0 0
        %1192 = vmatpush1.bf16.msra.mxu0 0
        %1193 = vmatprep.subr.bf16.mxu0 0
        %1194 = vmatpush1.bf16.msra.mxu0 0
        %1195 = vmatprep.subr.bf16.mxu0 0
        %1196 = vmatpush1.bf16.msra.mxu0 0
        %1197 = vmatprep.subr.bf16.mxu0 0
        %1198 = vmatpush1.bf16.msra.mxu0 0
        %1199 = vmatprep.subr.bf16.mxu0 0
        %1200 = vmatpush1.bf16.msra.mxu0 0
        %1201 = vmatprep.subr.bf16.mxu0 0
        %1202 = vmatpush1.bf16.msra.mxu0 0
        %1203 = vmatprep.subr.bf16.mxu0 0
        %1204 = vmatpush1.bf16.msra.mxu0 0
        %1205 = vmatprep.mubr.bf16.mxu0 0
        %1206 = vmatmul.mubr.bf16.gmra.mrb[0].mxu0 %v1131
        %v1207 = vpop.f32.mrb[0].mxu0
        %v1208 = vadd.f32 %v1168, %v1207
        %v1209 = vpop.f32.mrb[0].mxu0
        %v1210 = vpop.f32.mrb[0].mxu0
        %v1211 = vpop.f32.mrb[0].mxu0
        %1212 = vdwg.mxu0
        %1213 = vst [vmem:[%s318] sm:$0xff] %v1208
        %v1214 = vpack.c.bf16 %v1121, %v1120
        %v1215 = vunpack.c.l.bf16 %v1214
        %v1216 = vunpack.c.h.bf16 %v1214
        %v1217 = vsub.f32 %v1120, %v1215
        %v1218 = vsub.f32 %v1121, %v1216
        %v1219 = vpack.c.bf16 %v1218, %v1217
        %v1220 = vld [vmem:[#allocation5] sm:$0xf]
        %v1222 = vsel %vm1129, %v1220, 0
        %1224 = vmatprep.subr.bf16.mxu0 0
        %1225 = vmatpush1.bf16.msra.mxu0 %v1219
        %1226 = vmatprep.subr.bf16.mxu0 0
        %1227 = vmatpush1.bf16.msra.mxu0 0
        %1228 = vmatprep.subr.bf16.mxu0 0
        %1229 = vmatpush1.bf16.msra.mxu0 0
        %1230 = vmatprep.subr.bf16.mxu0 0
        %1231 = vmatpush1.bf16.msra.mxu0 0
        %1232 = vmatprep.subr.bf16.mxu0 0
        %1233 = vmatpush1.bf16.msra.mxu0 0
        %1234 = vmatprep.subr.bf16.mxu0 0
        %1235 = vmatpush1.bf16.msra.mxu0 0
        %1236 = vmatprep.subr.bf16.mxu0 0
        %1237 = vmatpush1.bf16.msra.mxu0 0
        %1238 = vmatprep.subr.bf16.mxu0 0
        %1239 = vmatpush1.bf16.msra.mxu0 0
        %1240 = vmatprep.subr.bf16.mxu0 0
        %1241 = vmatpush1.bf16.msra.mxu0 0
        %1242 = vmatprep.subr.bf16.mxu0 0
        %1243 = vmatpush1.bf16.msra.mxu0 0
        %1244 = vmatprep.subr.bf16.mxu0 0
        %1245 = vmatpush1.bf16.msra.mxu0 0
        %1246 = vmatprep.subr.bf16.mxu0 0
        %1247 = vmatpush1.bf16.msra.mxu0 0
        %1248 = vmatprep.subr.bf16.mxu0 0
        %1249 = vmatpush1.bf16.msra.mxu0 0
        %1250 = vmatprep.subr.bf16.mxu0 0
        %1251 = vmatpush1.bf16.msra.mxu0 0
        %1252 = vmatprep.subr.bf16.mxu0 0
        %1253 = vmatpush1.bf16.msra.mxu0 0
        %1254 = vmatprep.subr.bf16.mxu0 0
        %1255 = vmatpush1.bf16.msra.mxu0 0
        %1256 = vmatprep.mubr.bf16.mxu0 0
        %1257 = vmatmul.mubr.bf16.gmra.mrb[0].mxu0 %v1222
        %v1258 = vpop.f32.mrb[0].mxu0
        %v1259 = vadd.f32 0.0, %v1258
        %v1260 = vpop.f32.mrb[0].mxu0
        %v1261 = vpop.f32.mrb[0].mxu0
        %v1262 = vpop.f32.mrb[0].mxu0
        %1263 = vdwg.mxu0
        %1264 = vmatprep.subr.bf16.mxu0 0
        %1265 = vmatpush1.bf16.msra.mxu0 %v1214
        %1266 = vmatprep.subr.bf16.mxu0 0
        %1267 = vmatpush1.bf16.msra.mxu0 0
        %1268 = vmatprep.subr.bf16.mxu0 0
        %1269 = vmatpush1.bf16.msra.mxu0 0
        %1270 = vmatprep.subr.bf16.mxu0 0
        %1271 = vmatpush1.bf16.msra.mxu0 0
        %1272 = vmatprep.subr.bf16.mxu0 0
        %1273 = vmatpush1.bf16.msra.mxu0 0
        %1274 = vmatprep.subr.bf16.mxu0 0
        %1275 = vmatpush1.bf16.msra.mxu0 0
        %1276 = vmatprep.subr.bf16.mxu0 0
        %1277 = vmatpush1.bf16.msra.mxu0 0
        %1278 = vmatprep.subr.bf16.mxu0 0
        %1279 = vmatpush1.bf16.msra.mxu0 0
        %1280 = vmatprep.subr.bf16.mxu0 0
        %1281 = vmatpush1.bf16.msra.mxu0 0
        %1282 = vmatprep.subr.bf16.mxu0 0
        %1283 = vmatpush1.bf16.msra.mxu0 0
        %1284 = vmatprep.subr.bf16.mxu0 0
        %1285 = vmatpush1.bf16.msra.mxu0 0
        %1286 = vmatprep.subr.bf16.mxu0 0
        %1287 = vmatpush1.bf16.msra.mxu0 0
        %1288 = vmatprep.subr.bf16.mxu0 0
        %1289 = vmatpush1.bf16.msra.mxu0 0
        %1290 = vmatprep.subr.bf16.mxu0 0
        %1291 = vmatpush1.bf16.msra.mxu0 0
        %1292 = vmatprep.subr.bf16.mxu0 0
        %1293 = vmatpush1.bf16.msra.mxu0 0
        %1294 = vmatprep.subr.bf16.mxu0 0
        %1295 = vmatpush1.bf16.msra.mxu0 0
        %1296 = vmatprep.mubr.bf16.mxu0 0
        %1297 = vmatmul.mubr.bf16.gmra.mrb[0].mxu0 %v1222
        %v1298 = vpop.f32.mrb[0].mxu0
        %v1299 = vadd.f32 %v1259, %v1298
        %v1300 = vpop.f32.mrb[0].mxu0
        %v1301 = vpop.f32.mrb[0].mxu0
        %v1302 = vpop.f32.mrb[0].mxu0
        %1303 = vdwg.mxu0
        %1304 = vst [vmem:[%s325] sm:$0xff] %v1299
        %s1305 = sand.u32 %s128, 1
        %s1306 = scalar_lea.sflag [#allocation4], %s1305
        %s1307 = sand.u32 %s128, 1
        %s1308 = smul.addr %s1307, 32
        %s1309 = scalar_lea.vmem [#allocation8], %s1308
        %s1310 = sand.u32 %s25, 1
        %s1311 = scalar_lea.sflag [#allocation10], %s1310
        %s1312 = sand.u32 %s158, 1
        %s1313 = smul.addr %s1312, 8
        %s1314 = scalar_lea.vmem [#allocation9], %s1313
        %s1315 = sand.u32 %s25, 1
        %s1316 = scalar_lea.sflag [#allocation10], %s1315
        %s1317 = sand.u32 %s188, 1
        %s1318 = smul.addr %s1317, 8
        %s1319 = scalar_lea.vmem [#allocation11], %s1318
        // Predicated region
        $region45: #{tpu_custom_call.1} parent=31 // pred_check
          %p1320 = pneg %p138
        $region46: #{tpu_custom_call.1} parent=31 // pred_check_branch
          %1322 = sbr.rel (%p1320) target = $region48
        $region47: #{tpu_custom_call.1} parent=31 // pred_region
          %s1323 = smul.u32 2, %s31
          %s1324 = smul.u32 2, %s32
          %s1326 = ssub.s32 512, 512
          %1327 = vsyncadd %s1306, %s1326
          %s1328 = smul.addr %s1323, 2
          %s1329 = sadd.s32 %s1324, %s1328
          %s1330 = smul.addr %s30, 8
          %s1331 = sadd.s32 %s1329, %s1330
          %s1332 = smul.addr %s1331, 128
          %s1333 = scalar_lea.hbm %s3, %s1332
          %s1334 = sshll.u32 %s1309, 4
          %s1335 = int_to_ptr.vmem [resolvable:$true] %s1334
          %1340 = dma.vmem_to_hbm [thread:$0]  %s1335, 512, %s1333, %s1306, 256, 256, 16
        $region48: #{tpu_custom_call.1} parent=31 // pred_fallthru
          _
        // Predicated region
        $region49: #{tpu_custom_call.1} parent=31 // pred_check
          %p1341 = pneg %p168
        $region50: #{tpu_custom_call.1} parent=31 // pred_check_branch
          %1343 = sbr.rel (%p1341) target = $region52
        $region51: #{tpu_custom_call.1} parent=31 // pred_region
          %s1345 = ssub.s32 128, 128
          %1346 = vsyncadd %s1311, %s1345
          %s1347 = sadd.s32 %s32, %s31
          %s1348 = smul.addr %s30, 2
          %s1349 = sadd.s32 %s1347, %s1348
          %s1350 = smul.addr %s1349, 128
          %s1351 = scalar_lea.hbm %s4, %s1350
          %s1353 = sshll.u32 %s1314, 4
          %s1354 = int_to_ptr.vmem [resolvable:$true] %s1353
          %1356 = dma.vmem_to_hbm [thread:$0]  %s1354, 128, %s1351, %s1311
        $region52: #{tpu_custom_call.1} parent=31 // pred_fallthru
          _
        // Predicated region
        $region53: #{tpu_custom_call.1} parent=31 // pred_check
          %p1357 = pneg %p198
        $region54: #{tpu_custom_call.1} parent=31 // pred_check_branch
          %1359 = sbr.rel (%p1357) target = $region56
        $region55: #{tpu_custom_call.1} parent=31 // pred_region
          %s1361 = ssub.s32 128, 128
          %1362 = vsyncadd %s1316, %s1361
          %s1363 = sadd.s32 %s32, %s31
          %s1364 = smul.addr %s30, 2
          %s1365 = sadd.s32 %s1363, %s1364
          %s1366 = smul.addr %s1365, 128
          %s1367 = scalar_lea.hbm %s5, %s1366
          %s1369 = sshll.u32 %s1319, 4
          %s1370 = int_to_ptr.vmem [resolvable:$true] %s1369
          %1372 = dma.vmem_to_hbm [thread:$0]  %s1370, 128, %s1367, %s1316
        $region56: #{tpu_custom_call.1} parent=31 // pred_fallthru
          _
      $region32: #{tpu_custom_call.1} parent=5 // pred_fallthru
        _
      %p1373 = scmp.le.s32.totalorder 2, %s20
      // Predicated region
      $region57: #{tpu_custom_call.1} parent=5 // pred_check
        %p1374 = pneg %p1373
      $region58: #{tpu_custom_call.1} parent=5 // pred_check_branch
        %1376 = sbr.rel (%p1374) target = $region60
      $region59: #{tpu_custom_call.1} parent=5 // pred_region
        %s1377 = ssub.s32 %s20, 2
        // Predicated region
        $region61: #{tpu_custom_call.1} parent=59 // pred_check
          %p1378 = pneg %p144
        $region62: #{tpu_custom_call.1} parent=59 // pred_check_branch
          %1380 = sbr.rel (%p1378) target = $region64
        $region63: #{tpu_custom_call.1} parent=59 // pred_region
          %s1381 = sand.u32 %s129, 1
          %s1382 = scalar_lea.sflag [#allocation4], %s1381
          %s1383 = sand.u32 %s129, 1
          %s1384 = smul.addr %s1383, 32
          %s1385 = scalar_lea.vmem [#allocation8], %s1384
          %1386 = dma.done %s1382, 512
        $region64: #{tpu_custom_call.1} parent=59 // pred_fallthru
          _
        // Predicated region
        $region65: #{tpu_custom_call.1} parent=59 // pred_check
          %p1387 = pneg %p174
        $region66: #{tpu_custom_call.1} parent=59 // pred_check_branch
          %1389 = sbr.rel (%p1387) target = $region68
        $region67: #{tpu_custom_call.1} parent=59 // pred_region
          %s1390 = sand.u32 %s26, 1
          %s1391 = scalar_lea.sflag [#allocation10], %s1390
          %s1392 = sand.u32 %s159, 1
          %s1393 = smul.addr %s1392, 8
          %s1394 = scalar_lea.vmem [#allocation9], %s1393
          %1395 = dma.done %s1391, 128
        $region68: #{tpu_custom_call.1} parent=59 // pred_fallthru
          _
        // Predicated region
        $region69: #{tpu_custom_call.1} parent=59 // pred_check
          %p1396 = pneg %p204
        $region70: #{tpu_custom_call.1} parent=59 // pred_check_branch
          %1398 = sbr.rel (%p1396) target = $region72
        $region71: #{tpu_custom_call.1} parent=59 // pred_region
          %s1399 = sand.u32 %s26, 1
          %s1400 = scalar_lea.sflag [#allocation10], %s1399
          %s1401 = sand.u32 %s189, 1
          %s1402 = smul.addr %s1401, 8
          %s1403 = scalar_lea.vmem [#allocation11], %s1402
          %1404 = dma.done %s1400, 128
        $region72: #{tpu_custom_call.1} parent=59 // pred_fallthru
          _
      $region60: #{tpu_custom_call.1} parent=5 // pred_fallthru
        _
    $region6: #{tpu_custom_call.1} parent=1 // loop_footer
      %s24 = sadd.s32 1, %s20
    $region7: #{tpu_custom_call.1} parent=1 // loop_footer_branch
      %19 = sbr.rel target = $region3
    $region8: #{tpu_custom_call.1} parent=1 // loop_exit
      _
    %1405 = vsyncpa [#allocation3], 1
    %s1406 = scalar_lea.sflag [#allocation3], 1
    %1407 = vsyncpa %s1406, 1
    %1408 = vsyncpa [#allocation6], 1
    %1409 = vsyncpa [#allocation4], 1
    %s1410 = scalar_lea.sflag [#allocation4], 1
    %1411 = vsyncpa %s1410, 1
    %1412 = vsyncpa [#allocation10], 1
    %s1413 = scalar_lea.sflag [#allocation10], 1
    %1414 = vsyncpa %s1413, 1

</llo_original>
